<compile_context>
chip_gen: v6e
topology: v6e:2x2x1
jax: 0.10.0
libtpu: 0.0.40
codegen_flags: <defaults>
</compile_context>

<pallas_src>
import functools

import jax
import jax.numpy as jnp
from jax.experimental import pallas as pl
from jax.experimental.pallas import tpu as pltpu


# ----------------------------------------------------------------------------
# Fused kernel: one (batch, q-tile) per grid step.
# ----------------------------------------------------------------------------
def _cross_attention_kernel(x_ref, c_ref, wq_ref, wkv_ref, wout_ref, bout_ref,
                            o_ref, kv_ref, oacc_ref, *, heads, dim_head, scale):
    """Refs:
      x_ref    : (1, tq, dim)       image_embed tile (queries)
      c_ref    : (1, Nk, dim)       com_embed (full context)
      wq_ref   : (dim, inner)
      wkv_ref  : (dim, 2*inner)
      wout_ref : (inner, dim)
      bout_ref : (1, dim)
      o_ref    : (1, tq, dim)
      kv_ref   : (Nk, 2*inner)      VMEM scratch, input dtype (per-batch kv)
      oacc_ref : (tq, inner)        VMEM scratch, f32 (merged head outputs)
    """
    inner = heads * dim_head
    cdt = kv_ref.dtype                         # MXU operand dtype == input dtype

    # kv projection hoisted out of the q-tile axis: computed once per batch
    # (q-tile axis is the innermost, serial/"arbitrary" grid axis).
    @pl.when(pl.program_id(1) == 0)
    def _():
        kv = jnp.dot(c_ref[0], wkv_ref[...], preferred_element_type=jnp.float32)
        kv_ref[...] = kv.astype(cdt)

    # to_q with the softmax scale folded into the f32 accumulator, then one
    # downcast so the per-head matmuls run with native-dtype MXU operands.
    q = (jnp.dot(x_ref[0], wq_ref[...], preferred_element_type=jnp.float32)
         * scale).astype(cdt)                                         # (tq, inner)

    # Per-head attention; H is small so the loop is statically unrolled.
    for h in range(heads):
        lo, hi = h * dim_head, (h + 1) * dim_head
        qh = q[:, lo:hi]                                              # (tq, D)
        kh = kv_ref[:, lo:hi]                                         # (Nk, D)
        vh = kv_ref[:, inner + lo:inner + hi]                         # (Nk, D)

        # q @ k^T as a last-dim contraction (no XLU transpose of k), f32 acc.
        s = jax.lax.dot_general(qh, kh, (((1,), (1,)), ((), ())),
                                preferred_element_type=jnp.float32)   # (tq, Nk)

        m = jnp.max(s, axis=-1, keepdims=True)                        # f32, stable
        p = jnp.exp(s - m)
        denom = jnp.sum(p, axis=-1, keepdims=True)

        # Deferred normalization: normalize the (tq, D) PV result, not the
        # (tq, Nk) probabilities; p is fed to the MXU in the input dtype.
        pv = jnp.dot(p.astype(cdt), vh, preferred_element_type=jnp.float32)
        oacc_ref[:, lo:hi] = pv * pl.reciprocal(denom, approx=True)

    # to_out: Linear(inner, dim) + bias, fused.  Dropout(0.0) is identity.
    y = jnp.dot(oacc_ref[...].astype(wout_ref.dtype), wout_ref[...],
                preferred_element_type=jnp.float32)
    y = y + bout_ref[...].astype(jnp.float32)                         # (1, dim) bcast
    o_ref[0] = y.astype(o_ref.dtype)


# ----------------------------------------------------------------------------
# Forward wrapper: one pallas_call for the whole module forward.
# ----------------------------------------------------------------------------
def cross_attention_forward(params, image_embed, com_embed, heads, dim_head):
    """image_embed: (B, Nq, dim), com_embed: (B, Nk, dim) -> (B, Nq, dim)."""
    B, Nq, dim = image_embed.shape
    _, Nk, _ = com_embed.shape
    inner = heads * dim_head
    scale = dim_head ** -0.5
    cdt = image_embed.dtype

    # Large query tiles amortize per-grid-step overhead; trailing partial
    # tiles are handled by the cdiv grid + Pallas block masking.
    tq = Nq if Nq <= 256 else 256
    nq_tiles = pl.cdiv(Nq, tq)

    # Align weights to the input dtype so every MXU matmul uses native-dtype
    # operands (f32 accumulation happens inside the kernel).
    w_q = params["w_q"].astype(cdt)
    w_kv = params["w_kv"].astype(cdt)
    w_out = params["w_out"].astype(cdt)
    bout = params["b_out"].reshape(1, dim).astype(cdt)

    kernel = functools.partial(_cross_attention_kernel,
                               heads=heads, dim_head=dim_head, scale=scale)

    return pl.pallas_call(
        kernel,
        out_shape=jax.ShapeDtypeStruct((B, Nq, dim), cdt),
        grid_spec=pltpu.PrefetchScalarGridSpec(
            num_scalar_prefetch=0,
            grid=(B, nq_tiles),
            in_specs=[
                pl.BlockSpec((1, tq, dim), lambda b, i: (b, i, 0)),    # image tile
                pl.BlockSpec((1, Nk, dim), lambda b, i: (b, 0, 0)),    # context
                pl.BlockSpec((dim, inner), lambda b, i: (0, 0)),       # w_q  (resident)
                pl.BlockSpec((dim, 2 * inner), lambda b, i: (0, 0)),   # w_kv (resident)
                pl.BlockSpec((inner, dim), lambda b, i: (0, 0)),       # w_out(resident)
                pl.BlockSpec((1, dim), lambda b, i: (0, 0)),           # b_out
            ],
            out_specs=pl.BlockSpec((1, tq, dim), lambda b, i: (b, i, 0)),
            scratch_shapes=[
                pltpu.VMEM((Nk, 2 * inner), cdt),       # per-batch kv (k | v)
                pltpu.VMEM((tq, inner), jnp.float32),   # merged head outputs
            ],
        ),
        compiler_params=pltpu.CompilerParams(
            # batch axis parallel (megacore); q-tile axis serial so the
            # per-batch kv scratch is valid across q tiles.
            dimension_semantics=("parallel", "arbitrary"),
            vmem_limit_bytes=64 * 1024 * 1024,
        ),
    )(image_embed, com_embed, w_q, w_kv, w_out, bout)


# ----------------------------------------------------------------------------
# Deterministic parameter init (shapes from the module __init__)
# ----------------------------------------------------------------------------
def init_params(key, dim, heads, dim_head):
    inner_dim = heads * dim_head
    k1, k2, k3, k4 = jax.random.split(key, 4)

    def uniform(k, shape, fan_in):
        bound = 1.0 / jnp.sqrt(fan_in)
        return jax.random.uniform(k, shape, jnp.float32, -bound, bound)

    return {
        # stored as (in, out) so the kernel computes x @ W directly
        "w_q": uniform(k1, (dim, inner_dim), dim),
        "w_kv": uniform(k2, (dim, 2 * inner_dim), dim),
        "w_out": uniform(k3, (inner_dim, dim), inner_dim),
        "b_out": uniform(k4, (dim,), inner_dim),
    }


# ----------------------------------------------------------------------------
# Pure-JAX reference (mirrors the PyTorch forward) for a correctness check.
# ----------------------------------------------------------------------------
def cross_attention_reference(params, image_embed, com_embed, heads, dim_head):
    B, Nq, dim = image_embed.shape
    _, Nk, _ = com_embed.shape
    inner = heads * dim_head
    scale = dim_head ** -0.5

    q = image_embed @ params["w_q"]
    kv = com_embed @ params["w_kv"]
    k, v = kv[..., :inner], kv[..., inner:]

    def split(t, n):
        return t.reshape(B, n, heads, dim_head).transpose(0, 2, 1, 3)

    qh, kh, vh = split(q, Nq), split(k, Nk), split(v, Nk)
    dots = jnp.einsum("bhqd,bhkd->bhqk", qh, kh) * scale
    attn = jax.nn.softmax(dots, axis=-1)
    out = jnp.einsum("bhqk,bhkd->bhqd", attn, vh)
    out = out.transpose(0, 2, 1, 3).reshape(B, Nq, inner)
    return out @ params["w_out"] + params["b_out"][None, None, :]


if __name__ == "__main__":
    B, dim, heads, dim_head = 2, 32, 4, 16
    Nq, Nk = 16, 8

    key = jax.random.PRNGKey(0)
    kp, kx, kc = jax.random.split(key, 3)
    params = init_params(kp, dim, heads, dim_head)
    image_embed = jax.random.normal(kx, (B, Nq, dim), jnp.float32)
    com_embed = jax.random.normal(kc, (B, Nk, dim), jnp.float32)

    out = cross_attention_forward(params, image_embed, com_embed, heads, dim_head)
    jax.block_until_ready(out)
    assert out.shape == (B, Nq, dim)

    ref = cross_attention_reference(params, image_embed, com_embed, heads, dim_head)
    assert jnp.allclose(out, ref, atol=2e-2, rtol=2e-2), "mismatch vs reference"

    print("KERNEL_OK")
</pallas_src>

<mosaic_0001>
module attributes {stable_mosaic.version = 11 : i64} {
  func.func @_cross_attention_kernel(%arg0: i32, %arg1: i32, %arg2: memref<1x16x32xf32, #tpu.memory_space<vmem>>, %arg3: memref<1x8x32xf32, #tpu.memory_space<vmem>>, %arg4: memref<32x64xf32, #tpu.memory_space<vmem>>, %arg5: memref<32x128xf32, #tpu.memory_space<vmem>>, %arg6: memref<64x32xf32, #tpu.memory_space<vmem>>, %arg7: memref<1x32xf32, #tpu.memory_space<vmem>>, %arg8: memref<1x16x32xf32, #tpu.memory_space<vmem>>, %arg9: memref<8x128xf32, #tpu.memory_space<vmem>>, %arg10: memref<16x64xf32, #tpu.memory_space<vmem>>) attributes {dimension_semantics = [#tpu.dimension_semantics<parallel>, #tpu.dimension_semantics<arbitrary>], iteration_bounds = array<i64: 2, 1>, scalar_prefetch = 0 : i64, scratch_operands = 2 : i64, tpu.core_type = #tpu.core_type<tc>, window_params = [{transform_indices = @transform_0, window_bounds = array<i64: 1, 16, 32>}, {transform_indices = @transform_1, window_bounds = array<i64: 1, 8, 32>}, {pipeline_mode = #tpu.pipeline_mode<synchronous>, transform_indices = @transform_2, window_bounds = array<i64: 32, 64>}, {pipeline_mode = #tpu.pipeline_mode<synchronous>, transform_indices = @transform_3, window_bounds = array<i64: 32, 128>}, {pipeline_mode = #tpu.pipeline_mode<synchronous>, transform_indices = @transform_4, window_bounds = array<i64: 64, 32>}, {pipeline_mode = #tpu.pipeline_mode<synchronous>, transform_indices = @transform_5, window_bounds = array<i64: 1, 32>}, {transform_indices = @transform_6, window_bounds = array<i64: 1, 16, 32>}]} {
    %c0_i32 = arith.constant 0 : i32
    %0 = arith.cmpi eq, %arg1, %c0_i32 : i32
    %1 = arith.extui %0 : i1 to i32
    %c0_i32_0 = arith.constant 0 : i32
    %2 = arith.cmpi ne, %1, %c0_i32_0 : i32
    scf.if %2 {
      %c0_49 = arith.constant 0 : index
      %c0_50 = arith.constant 0 : index
      %c0_51 = arith.constant 0 : index
      %82 = vector.load %arg3[%c0_49, %c0_50, %c0_51] : memref<1x8x32xf32, #tpu.memory_space<vmem>>, vector<1x8x32xf32>
      %83 = vector.shape_cast %82 : vector<1x8x32xf32> to vector<8x32xf32>
      %c0_52 = arith.constant 0 : index
      %c0_53 = arith.constant 0 : index
      %84 = vector.load %arg5[%c0_52, %c0_53] : memref<32x128xf32, #tpu.memory_space<vmem>>, vector<32x128xf32>
      %cst_54 = arith.constant dense<0.000000e+00> : vector<8x128xf32>
      %85 = tpu.matmul %83, %84, %cst_54 {dimension_numbers = #tpu.dot_dimension_numbers<[1], [0], [0], [1], [0, 0, 1, 1], [], []>} : vector<8x32xf32>, vector<32x128xf32>, vector<8x128xf32> -> vector<8x128xf32>
      %c0_55 = arith.constant 0 : index
      %c0_56 = arith.constant 0 : index
      %86 = vector.load %arg9[%c0_55, %c0_56] : memref<8x128xf32, #tpu.memory_space<vmem>>, vector<8x128xf32>
      tpu.vector_store %arg9[%c0_55, %c0_56], %85 {strides = array<i32>} : memref<8x128xf32, #tpu.memory_space<vmem>>, vector<8x128xf32>,
    } else {
    }
    %c0 = arith.constant 0 : index
    %c0_1 = arith.constant 0 : index
    %c0_2 = arith.constant 0 : index
    %3 = vector.load %arg2[%c0, %c0_1, %c0_2] : memref<1x16x32xf32, #tpu.memory_space<vmem>>, vector<1x16x32xf32>
    %4 = vector.shape_cast %3 : vector<1x16x32xf32> to vector<16x32xf32>
    %c0_3 = arith.constant 0 : index
    %c0_4 = arith.constant 0 : index
    %5 = vector.load %arg4[%c0_3, %c0_4] : memref<32x64xf32, #tpu.memory_space<vmem>>, vector<32x64xf32>
    %cst = arith.constant dense<0.000000e+00> : vector<16x64xf32>
    %6 = tpu.matmul %4, %5, %cst {dimension_numbers = #tpu.dot_dimension_numbers<[1], [0], [0], [1], [0, 0, 1, 1], [], []>} : vector<16x32xf32>, vector<32x64xf32>, vector<16x64xf32> -> vector<16x64xf32>
    %cst_5 = arith.constant 2.500000e-01 : f32
    %7 = vector.broadcast %cst_5 : f32 to vector<16x64xf32>
    %8 = arith.mulf %6, %7 : vector<16x64xf32>
    %9 = vector.extract_strided_slice %8 {offsets = [0, 0], sizes = [16, 16], strides = [1, 1]} : vector<16x64xf32> to vector<16x16xf32>
    %c0_6 = arith.constant 0 : index
    %c0_7 = arith.constant 0 : index
    %10 = vector.load %arg9[%c0_6, %c0_7] : memref<8x128xf32, #tpu.memory_space<vmem>>, vector<8x16xf32>
    %c0_8 = arith.constant 0 : index
    %c64 = arith.constant 64 : index
    %11 = vector.load %arg9[%c0_8, %c64] : memref<8x128xf32, #tpu.memory_space<vmem>>, vector<8x16xf32>
    %cst_9 = arith.constant dense<0.000000e+00> : vector<16x8xf32>
    %12 = tpu.matmul %9, %10, %cst_9 {dimension_numbers = #tpu.dot_dimension_numbers<[1], [1], [0], [0], [0, 0, 1, 0], [], []>} : vector<16x16xf32>, vector<8x16xf32>, vector<16x8xf32> -> vector<16x8xf32>
    %cst_10 = arith.constant dense<0xFF800000> : vector<16xf32>
    %13 = vector.multi_reduction <maximumf>, %12, %cst_10 [1] : vector<16x8xf32> to vector<16xf32>
    %14 = vector.shape_cast %13 : vector<16xf32> to vector<16x1xf32>
    %15 = vector.broadcast %14 : vector<16x1xf32> to vector<16x8xf32>
    %16 = arith.subf %12, %15 : vector<16x8xf32>
    %17 = math.exp %16 : vector<16x8xf32>
    %cst_11 = arith.constant dense<0.000000e+00> : vector<16xf32>
    %18 = vector.multi_reduction <add>, %17, %cst_11 [1] : vector<16x8xf32> to vector<16xf32>
    %19 = vector.shape_cast %18 : vector<16xf32> to vector<16x1xf32>
    %cst_12 = arith.constant dense<0.000000e+00> : vector<16x16xf32>
    %20 = tpu.matmul %17, %11, %cst_12 {dimension_numbers = #tpu.dot_dimension_numbers<[1], [0], [0], [1], [0, 0, 1, 1], [], []>} : vector<16x8xf32>, vector<8x16xf32>, vector<16x16xf32> -> vector<16x16xf32>
    %21 = tpu.reciprocal %19 {approx = true} : vector<16x1xf32> -> vector<16x1xf32>
    %22 = vector.broadcast %21 : vector<16x1xf32> to vector<16x16xf32>
    %23 = arith.mulf %20, %22 : vector<16x16xf32>
    %c0_13 = arith.constant 0 : index
    %c0_14 = arith.constant 0 : index
    %24 = vector.load %arg10[%c0_13, %c0_14] : memref<16x64xf32, #tpu.memory_space<vmem>>, vector<16x16xf32>
    tpu.vector_store %arg10[%c0_13, %c0_14], %23 {strides = array<i32>} : memref<16x64xf32, #tpu.memory_space<vmem>>, vector<16x16xf32>,
    %25 = vector.extract_strided_slice %8 {offsets = [0, 16], sizes = [16, 16], strides = [1, 1]} : vector<16x64xf32> to vector<16x16xf32>
    %c0_15 = arith.constant 0 : index
    %c16 = arith.constant 16 : index
    %26 = vector.load %arg9[%c0_15, %c16] : memref<8x128xf32, #tpu.memory_space<vmem>>, vector<8x16xf32>
    %c0_16 = arith.constant 0 : index
    %c80 = arith.constant 80 : index
    %27 = vector.load %arg9[%c0_16, %c80] : memref<8x128xf32, #tpu.memory_space<vmem>>, vector<8x16xf32>
    %cst_17 = arith.constant dense<0.000000e+00> : vector<16x8xf32>
    %28 = tpu.matmul %25, %26, %cst_17 {dimension_numbers = #tpu.dot_dimension_numbers<[1], [1], [0], [0], [0, 0, 1, 0], [], []>} : vector<16x16xf32>, vector<8x16xf32>, vector<16x8xf32> -> vector<16x8xf32>
    %cst_18 = arith.constant dense<0xFF800000> : vector<16xf32>
    %29 = vector.multi_reduction <maximumf>, %28, %cst_18 [1] : vector<16x8xf32> to vector<16xf32>
    %30 = vector.shape_cast %29 : vector<16xf32> to vector<16x1xf32>
    %31 = vector.broadcast %30 : vector<16x1xf32> to vector<16x8xf32>
    %32 = arith.subf %28, %31 : vector<16x8xf32>
    %33 = math.exp %32 : vector<16x8xf32>
    %cst_19 = arith.constant dense<0.000000e+00> : vector<16xf32>
    %34 = vector.multi_reduction <add>, %33, %cst_19 [1] : vector<16x8xf32> to vector<16xf32>
    %35 = vector.shape_cast %34 : vector<16xf32> to vector<16x1xf32>
    %cst_20 = arith.constant dense<0.000000e+00> : vector<16x16xf32>
    %36 = tpu.matmul %33, %27, %cst_20 {dimension_numbers = #tpu.dot_dimension_numbers<[1], [0], [0], [1], [0, 0, 1, 1], [], []>} : vector<16x8xf32>, vector<8x16xf32>, vector<16x16xf32> -> vector<16x16xf32>
    %37 = tpu.reciprocal %35 {approx = true} : vector<16x1xf32> -> vector<16x1xf32>
    %38 = vector.broadcast %37 : vector<16x1xf32> to vector<16x16xf32>
    %39 = arith.mulf %36, %38 : vector<16x16xf32>
    %c0_21 = arith.constant 0 : index
    %c16_22 = arith.constant 16 : index
    %40 = vector.load %arg10[%c0_21, %c16_22] : memref<16x64xf32, #tpu.memory_space<vmem>>, vector<16x16xf32>
    tpu.vector_store %arg10[%c0_21, %c16_22], %39 {strides = array<i32>} : memref<16x64xf32, #tpu.memory_space<vmem>>, vector<16x16xf32>,
    %41 = vector.extract_strided_slice %8 {offsets = [0, 32], sizes = [16, 16], strides = [1, 1]} : vector<16x64xf32> to vector<16x16xf32>
    %c0_23 = arith.constant 0 : index
    %c32 = arith.constant 32 : index
    %42 = vector.load %arg9[%c0_23, %c32] : memref<8x128xf32, #tpu.memory_space<vmem>>, vector<8x16xf32>
    %c0_24 = arith.constant 0 : index
    %c96 = arith.constant 96 : index
    %43 = vector.load %arg9[%c0_24, %c96] : memref<8x128xf32, #tpu.memory_space<vmem>>, vector<8x16xf32>
    %cst_25 = arith.constant dense<0.000000e+00> : vector<16x8xf32>
    %44 = tpu.matmul %41, %42, %cst_25 {dimension_numbers = #tpu.dot_dimension_numbers<[1], [1], [0], [0], [0, 0, 1, 0], [], []>} : vector<16x16xf32>, vector<8x16xf32>, vector<16x8xf32> -> vector<16x8xf32>
    %cst_26 = arith.constant dense<0xFF800000> : vector<16xf32>
    %45 = vector.multi_reduction <maximumf>, %44, %cst_26 [1] : vector<16x8xf32> to vector<16xf32>
    %46 = vector.shape_cast %45 : vector<16xf32> to vector<16x1xf32>
    %47 = vector.broadcast %46 : vector<16x1xf32> to vector<16x8xf32>
    %48 = arith.subf %44, %47 : vector<16x8xf32>
    %49 = math.exp %48 : vector<16x8xf32>
    %cst_27 = arith.constant dense<0.000000e+00> : vector<16xf32>
    %50 = vector.multi_reduction <add>, %49, %cst_27 [1] : vector<16x8xf32> to vector<16xf32>
    %51 = vector.shape_cast %50 : vector<16xf32> to vector<16x1xf32>
    %cst_28 = arith.constant dense<0.000000e+00> : vector<16x16xf32>
    %52 = tpu.matmul %49, %43, %cst_28 {dimension_numbers = #tpu.dot_dimension_numbers<[1], [0], [0], [1], [0, 0, 1, 1], [], []>} : vector<16x8xf32>, vector<8x16xf32>, vector<16x16xf32> -> vector<16x16xf32>
    %53 = tpu.reciprocal %51 {approx = true} : vector<16x1xf32> -> vector<16x1xf32>
    %54 = vector.broadcast %53 : vector<16x1xf32> to vector<16x16xf32>
    %55 = arith.mulf %52, %54 : vector<16x16xf32>
    %c0_29 = arith.constant 0 : index
    %c32_30 = arith.constant 32 : index
    %56 = vector.load %arg10[%c0_29, %c32_30] : memref<16x64xf32, #tpu.memory_space<vmem>>, vector<16x16xf32>
    tpu.vector_store %arg10[%c0_29, %c32_30], %55 {strides = array<i32>} : memref<16x64xf32, #tpu.memory_space<vmem>>, vector<16x16xf32>,
    %57 = vector.extract_strided_slice %8 {offsets = [0, 48], sizes = [16, 16], strides = [1, 1]} : vector<16x64xf32> to vector<16x16xf32>
    %c0_31 = arith.constant 0 : index
    %c48 = arith.constant 48 : index
    %58 = vector.load %arg9[%c0_31, %c48] : memref<8x128xf32, #tpu.memory_space<vmem>>, vector<8x16xf32>
    %c0_32 = arith.constant 0 : index
    %c112 = arith.constant 112 : index
    %59 = vector.load %arg9[%c0_32, %c112] : memref<8x128xf32, #tpu.memory_space<vmem>>, vector<8x16xf32>
    %cst_33 = arith.constant dense<0.000000e+00> : vector<16x8xf32>
    %60 = tpu.matmul %57, %58, %cst_33 {dimension_numbers = #tpu.dot_dimension_numbers<[1], [1], [0], [0], [0, 0, 1, 0], [], []>} : vector<16x16xf32>, vector<8x16xf32>, vector<16x8xf32> -> vector<16x8xf32>
    %cst_34 = arith.constant dense<0xFF800000> : vector<16xf32>
    %61 = vector.multi_reduction <maximumf>, %60, %cst_34 [1] : vector<16x8xf32> to vector<16xf32>
    %62 = vector.shape_cast %61 : vector<16xf32> to vector<16x1xf32>
    %63 = vector.broadcast %62 : vector<16x1xf32> to vector<16x8xf32>
    %64 = arith.subf %60, %63 : vector<16x8xf32>
    %65 = math.exp %64 : vector<16x8xf32>
    %cst_35 = arith.constant dense<0.000000e+00> : vector<16xf32>
    %66 = vector.multi_reduction <add>, %65, %cst_35 [1] : vector<16x8xf32> to vector<16xf32>
    %67 = vector.shape_cast %66 : vector<16xf32> to vector<16x1xf32>
    %cst_36 = arith.constant dense<0.000000e+00> : vector<16x16xf32>
    %68 = tpu.matmul %65, %59, %cst_36 {dimension_numbers = #tpu.dot_dimension_numbers<[1], [0], [0], [1], [0, 0, 1, 1], [], []>} : vector<16x8xf32>, vector<8x16xf32>, vector<16x16xf32> -> vector<16x16xf32>
    %69 = tpu.reciprocal %67 {approx = true} : vector<16x1xf32> -> vector<16x1xf32>
    %70 = vector.broadcast %69 : vector<16x1xf32> to vector<16x16xf32>
    %71 = arith.mulf %68, %70 : vector<16x16xf32>
    %c0_37 = arith.constant 0 : index
    %c48_38 = arith.constant 48 : index
    %72 = vector.load %arg10[%c0_37, %c48_38] : memref<16x64xf32, #tpu.memory_space<vmem>>, vector<16x16xf32>
    tpu.vector_store %arg10[%c0_37, %c48_38], %71 {strides = array<i32>} : memref<16x64xf32, #tpu.memory_space<vmem>>, vector<16x16xf32>,
    %c0_39 = arith.constant 0 : index
    %c0_40 = arith.constant 0 : index
    %73 = vector.load %arg10[%c0_39, %c0_40] : memref<16x64xf32, #tpu.memory_space<vmem>>, vector<16x64xf32>
    %c0_41 = arith.constant 0 : index
    %c0_42 = arith.constant 0 : index
    %74 = vector.load %arg6[%c0_41, %c0_42] : memref<64x32xf32, #tpu.memory_space<vmem>>, vector<64x32xf32>
    %cst_43 = arith.constant dense<0.000000e+00> : vector<16x32xf32>
    %75 = tpu.matmul %73, %74, %cst_43 {dimension_numbers = #tpu.dot_dimension_numbers<[1], [0], [0], [1], [0, 0, 1, 1], [], []>} : vector<16x64xf32>, vector<64x32xf32>, vector<16x32xf32> -> vector<16x32xf32>
    %c0_44 = arith.constant 0 : index
    %c0_45 = arith.constant 0 : index
    %76 = vector.load %arg7[%c0_44, %c0_45] : memref<1x32xf32, #tpu.memory_space<vmem>>, vector<1x32xf32>
    %77 = vector.broadcast %76 : vector<1x32xf32> to vector<16x32xf32>
    %78 = arith.addf %75, %77 : vector<16x32xf32>
    %c0_46 = arith.constant 0 : index
    %c0_47 = arith.constant 0 : index
    %c0_48 = arith.constant 0 : index
    %79 = vector.load %arg8[%c0_46, %c0_47, %c0_48] : memref<1x16x32xf32, #tpu.memory_space<vmem>>, vector<1x16x32xf32>
    %80 = vector.shape_cast %79 : vector<1x16x32xf32> to vector<16x32xf32>
    %81 = vector.shape_cast %78 : vector<16x32xf32> to vector<1x16x32xf32>
    tpu.vector_store %arg8[%c0_46, %c0_47, %c0_48], %81 {strides = array<i32>} : memref<1x16x32xf32, #tpu.memory_space<vmem>>, vector<1x16x32xf32>,
    return
  }
  func.func @transform_0(%arg0: i32, %arg1: i32) -> (i32, i32, i32) {
    %c0_i32 = arith.constant 0 : i32
    %c0_i32_0 = arith.constant 0 : i32
    return %arg0, %arg1, %c0_i32 : i32, i32, i32
  }
  func.func @transform_1(%arg0: i32, %arg1: i32) -> (i32, i32, i32) {
    %c0_i32 = arith.constant 0 : i32
    %c0_i32_0 = arith.constant 0 : i32
    %c0_i32_1 = arith.constant 0 : i32
    return %arg0, %c0_i32, %c0_i32_0 : i32, i32, i32
  }
  func.func @transform_2(%arg0: i32, %arg1: i32) -> (i32, i32) {
    %c0_i32 = arith.constant 0 : i32
    %c0_i32_0 = arith.constant 0 : i32
    %c0_i32_1 = arith.constant 0 : i32
    return %c0_i32, %c0_i32_0 : i32, i32
  }
  func.func @transform_3(%arg0: i32, %arg1: i32) -> (i32, i32) {
    %c0_i32 = arith.constant 0 : i32
    %c0_i32_0 = arith.constant 0 : i32
    %c0_i32_1 = arith.constant 0 : i32
    return %c0_i32, %c0_i32_0 : i32, i32
  }
  func.func @transform_4(%arg0: i32, %arg1: i32) -> (i32, i32) {
    %c0_i32 = arith.constant 0 : i32
    %c0_i32_0 = arith.constant 0 : i32
    %c0_i32_1 = arith.constant 0 : i32
    return %c0_i32, %c0_i32_0 : i32, i32
  }
  func.func @transform_5(%arg0: i32, %arg1: i32) -> (i32, i32) {
    %c0_i32 = arith.constant 0 : i32
    %c0_i32_0 = arith.constant 0 : i32
    %c0_i32_1 = arith.constant 0 : i32
    return %c0_i32, %c0_i32_0 : i32, i32
  }
  func.func @transform_6(%arg0: i32, %arg1: i32) -> (i32, i32, i32) {
    %c0_i32 = arith.constant 0 : i32
    %c0_i32_0 = arith.constant 0 : i32
    return %arg0, %arg1, %c0_i32 : i32, i32, i32
  }
}

</mosaic_0001>

<llo_original>
// kernel: tpu_custom_call.1
$region0: #{tpu_custom_call.1}
  #allocation0 [shape = 'u32[]', space=smem, size = 0x4, offset = 0x4, fixed_abs, tag = 'smem constant byte address 0x4 - core index']
  #allocation1 [shape = 'u32[144,128]{1,0:T(1,128)}', space=vmem, size = 0x12000, scoped, tag = 'internal scratch']
  #allocation2 [shape = 'f32[8,128]{1,0:T(8,128)}', space=vmem, size = 0x1000, scoped, tag = 'scratch operand']
  #allocation3 [shape = 'f32[16,64]{1,0:T(8,128)}', space=vmem, size = 0x2000, scoped, tag = 'scratch operand']
  %s0 = inlined_call_operand.vmem [shape: f32[2,16,32], index: 0, kind: input, shape index: {}]
  %s1 = inlined_call_operand.hbm [shape: f32[2,8,32], index: 1, kind: input, shape index: {}]
  %s2 = inlined_call_operand.vmem [shape: f32[32,64], index: 2, kind: input, shape index: {}]
  %s3 = inlined_call_operand.vmem [shape: f32[32,128], index: 3, kind: input, shape index: {}]
  %s4 = inlined_call_operand.vmem [shape: f32[64,32], index: 4, kind: input, shape index: {}]
  %s5 = inlined_call_operand.vmem [shape: f32[1,32], index: 5, kind: input, shape index: {}]
  %s6 = inlined_call_operand.hbm [shape: f32[2,16,32], index: 6, kind: output, shape index: {}]
  %s7 = sld [smem:[#allocation0]]
  $region65: #{tpu_custom_call.1} parent=0
    _
  %s9 = ssub.s32 1, %s7
  %s10 = scalar_select 0, %s9, %s7
  $region1: #{tpu_custom_call.1} parent=0
    #allocation4 [shape = 'u8[8192]{0}', space=vmem, size = 0x2000, scoped, tag = 'input window, operand 1']
    #allocation5 [shape = 's32[2]{0}', space=sflag, size = 0x8, scoped, tag = 'scoped memory for tpu_custom_call.1']
    #allocation6 [shape = 's32[2]{0}', space=sflag, size = 0x8, scoped, tag = 'scoped memory for tpu_custom_call.1']
    #allocation7 [shape = 'u8[16384]{0}', space=vmem, size = 0x4000, scoped, tag = 'output window, operand 0']
    %11 = vsyncpa [#allocation5], 0
    %s12 = scalar_lea.sflag [#allocation5], 1
    %13 = vsyncpa %s12, 0
    %14 = vsyncpa [#allocation6], 0
    %s15 = scalar_lea.sflag [#allocation6], 1
    %16 = vsyncpa %s15, 0
    loop: start=0, step=1, limit=4
    $region2: #{tpu_custom_call.1} parent=1 // loop_pre_header
      _
    $region3: #{tpu_custom_call.1} parent=1 // loop_header
      %s18 = sphi 0, %s22
      %p19 = scmp.ge.s32.totalorder %s18, 4
      %s25 = sphi 0, %s37
      %s26 = sphi 0, %s33
      %s27 = sphi 0, %s25
      %s28 = sphi 0, %s26
      %s29 = sphi 0, %s27
      %s30 = sphi 0, %s28
      %s42 = sphi 0, %s44
      %s45 = sphi 0, %s42
      %s46 = sphi 0, %s45
      %s62 = sphi 0, %s46
      %s68 = sphi 0, %s70
      %s71 = sphi 0, %s68
      %s72 = sphi 0, %s71
      %s88 = sphi 0, %s72
      %s92 = sphi 0, %s92
      %s94 = sphi 0, %s92
      %s95 = sphi 0, %s94
      %s109 = sphi 0, %s95
      %s113 = sphi 0, %s113
      %s115 = sphi 0, %s113
      %s116 = sphi 0, %s115
      %s130 = sphi 0, %s116
      %s134 = sphi 0, %s134
      %s136 = sphi 0, %s134
      %s137 = sphi 0, %s136
      %s151 = sphi 0, %s137
      %s155 = sphi 0, %s155
      %s157 = sphi 0, %s155
      %s158 = sphi 0, %s157
      %s172 = sphi 0, %s158
      %s180 = sphi 0, %s182
      %s183 = sphi 0, %s180
      %s184 = sphi 0, %s183
      %s200 = sphi 0, %s184
    $region4: #{tpu_custom_call.1} parent=1 // loop_header_branch
      %21 = sbr.rel (%p19) target = $region8
    $region5: #{tpu_custom_call.1} parent=1 // loop_body
      %s23 = ssub.s32 %s18, 1
      %s24 = ssub.s32 %s18, 2
      %s31 = sadd.s32 1, %s26
      %p32 = scmp.ge.s32.totalorder %s31, 1
      %s33 = scalar_select %p32, 0, %s31
      %s34 = sadd.s32 1, %s25
      %s35 = scalar_select %p32, %s34, %s25
      %p36 = scmp.ge.s32.totalorder %s35, 2
      %s37 = scalar_select %p36, 0, %s35
      %s38 = ssub.s32 %s25, %s37
      %s39 = ssub.s32 %s26, %s33
      %s40 = sor.u32 %s38, %s39
      %p41 = scmp.eq.s32.totalorder %s40, 0
      %s43 = sadd.s32 %s42, 1
      %s44 = scalar_select %p41, %s42, %s43
      %p47 = pneg %p41
      %p48 = scmp.eq.s32.totalorder %s18, 1
      %p49 = por %p47, %p48
      %p50 = scmp.ne.s32.totalorder %s42, %s45
      %p51 = scmp.eq.s32.totalorder %s18, 0
      %p52 = por %p50, %p51
      %p53 = scmp.ne.s32.totalorder %s42, %s45
      %p54 = scmp.eq.s32.totalorder %s23, 1
      %p55 = por %p53, %p54
      %p56 = scmp.ne.s32.totalorder %s45, %s46
      %p57 = scmp.eq.s32.totalorder %s23, 0
      %p58 = por %p56, %p57
      %p59 = scmp.ne.s32.totalorder %s45, %s46
      %p60 = scmp.eq.s32.totalorder %s24, 1
      %p61 = por %p59, %p60
      %p63 = scmp.ne.s32.totalorder %s46, %s62
      %p64 = scmp.eq.s32.totalorder %s24, 0
      %p65 = por %p63, %p64
      %s66 = ssub.s32 %s25, %s37
      %p67 = scmp.eq.s32.totalorder %s66, 0
      %s69 = sadd.s32 %s68, 1
      %s70 = scalar_select %p67, %s68, %s69
      %p73 = pneg %p67
      %p74 = scmp.eq.s32.totalorder %s18, 1
      %p75 = por %p73, %p74
      %p76 = scmp.ne.s32.totalorder %s68, %s71
      %p77 = scmp.eq.s32.totalorder %s18, 0
      %p78 = por %p76, %p77
      %p79 = scmp.ne.s32.totalorder %s68, %s71
      %p80 = scmp.eq.s32.totalorder %s23, 1
      %p81 = por %p79, %p80
      %p82 = scmp.ne.s32.totalorder %s71, %s72
      %p83 = scmp.eq.s32.totalorder %s23, 0
      %p84 = por %p82, %p83
      %p85 = scmp.ne.s32.totalorder %s71, %s72
      %p86 = scmp.eq.s32.totalorder %s24, 1
      %p87 = por %p85, %p86
      %p89 = scmp.ne.s32.totalorder %s72, %s88
      %p90 = scmp.eq.s32.totalorder %s24, 0
      %p91 = por %p89, %p90
      %s93 = sadd.s32 %s92, 1
      %p96 = scmp.eq.s32.totalorder %s18, 1
      %p97 = scmp.ne.s32.totalorder %s92, %s94
      %p98 = scmp.eq.s32.totalorder %s18, 0
      %p99 = por %p97, %p98
      %p100 = scmp.ne.s32.totalorder %s92, %s94
      %p101 = scmp.eq.s32.totalorder %s23, 1
      %p102 = por %p100, %p101
      %p103 = scmp.ne.s32.totalorder %s94, %s95
      %p104 = scmp.eq.s32.totalorder %s23, 0
      %p105 = por %p103, %p104
      %p106 = scmp.ne.s32.totalorder %s94, %s95
      %p107 = scmp.eq.s32.totalorder %s24, 1
      %p108 = por %p106, %p107
      %p110 = scmp.ne.s32.totalorder %s95, %s109
      %p111 = scmp.eq.s32.totalorder %s24, 0
      %p112 = por %p110, %p111
      %s114 = sadd.s32 %s113, 1
      %p117 = scmp.eq.s32.totalorder %s18, 1
      %p118 = scmp.ne.s32.totalorder %s113, %s115
      %p119 = scmp.eq.s32.totalorder %s18, 0
      %p120 = por %p118, %p119
      %p121 = scmp.ne.s32.totalorder %s113, %s115
      %p122 = scmp.eq.s32.totalorder %s23, 1
      %p123 = por %p121, %p122
      %p124 = scmp.ne.s32.totalorder %s115, %s116
      %p125 = scmp.eq.s32.totalorder %s23, 0
      %p126 = por %p124, %p125
      %p127 = scmp.ne.s32.totalorder %s115, %s116
      %p128 = scmp.eq.s32.totalorder %s24, 1
      %p129 = por %p127, %p128
      %p131 = scmp.ne.s32.totalorder %s116, %s130
      %p132 = scmp.eq.s32.totalorder %s24, 0
      %p133 = por %p131, %p132
      %s135 = sadd.s32 %s134, 1
      %p138 = scmp.eq.s32.totalorder %s18, 1
      %p139 = scmp.ne.s32.totalorder %s134, %s136
      %p140 = scmp.eq.s32.totalorder %s18, 0
      %p141 = por %p139, %p140
      %p142 = scmp.ne.s32.totalorder %s134, %s136
      %p143 = scmp.eq.s32.totalorder %s23, 1
      %p144 = por %p142, %p143
      %p145 = scmp.ne.s32.totalorder %s136, %s137
      %p146 = scmp.eq.s32.totalorder %s23, 0
      %p147 = por %p145, %p146
      %p148 = scmp.ne.s32.totalorder %s136, %s137
      %p149 = scmp.eq.s32.totalorder %s24, 1
      %p150 = por %p148, %p149
      %p152 = scmp.ne.s32.totalorder %s137, %s151
      %p153 = scmp.eq.s32.totalorder %s24, 0
      %p154 = por %p152, %p153
      %s156 = sadd.s32 %s155, 1
      %p159 = scmp.eq.s32.totalorder %s18, 1
      %p160 = scmp.ne.s32.totalorder %s155, %s157
      %p161 = scmp.eq.s32.totalorder %s18, 0
      %p162 = por %p160, %p161
      %p163 = scmp.ne.s32.totalorder %s155, %s157
      %p164 = scmp.eq.s32.totalorder %s23, 1
      %p165 = por %p163, %p164
      %p166 = scmp.ne.s32.totalorder %s157, %s158
      %p167 = scmp.eq.s32.totalorder %s23, 0
      %p168 = por %p166, %p167
      %p169 = scmp.ne.s32.totalorder %s157, %s158
      %p170 = scmp.eq.s32.totalorder %s24, 1
      %p171 = por %p169, %p170
      %p173 = scmp.ne.s32.totalorder %s158, %s172
      %p174 = scmp.eq.s32.totalorder %s24, 0
      %p175 = por %p173, %p174
      %s176 = ssub.s32 %s25, %s37
      %s177 = ssub.s32 %s26, %s33
      %s178 = sor.u32 %s176, %s177
      %p179 = scmp.eq.s32.totalorder %s178, 0
      %s181 = sadd.s32 %s180, 1
      %s182 = scalar_select %p179, %s180, %s181
      %p185 = pneg %p179
      %p186 = scmp.eq.s32.totalorder %s18, 1
      %p187 = por %p185, %p186
      %p188 = scmp.ne.s32.totalorder %s180, %s183
      %p189 = scmp.eq.s32.totalorder %s18, 0
      %p190 = por %p188, %p189
      %p191 = scmp.ne.s32.totalorder %s180, %s183
      %p192 = scmp.eq.s32.totalorder %s23, 1
      %p193 = por %p191, %p192
      %p194 = scmp.ne.s32.totalorder %s183, %s184
      %p195 = scmp.eq.s32.totalorder %s23, 0
      %p196 = por %p194, %p195
      %p197 = scmp.ne.s32.totalorder %s183, %s184
      %p198 = scmp.eq.s32.totalorder %s24, 1
      %p199 = por %p197, %p198
      %p201 = scmp.ne.s32.totalorder %s184, %s200
      %p202 = scmp.eq.s32.totalorder %s24, 0
      %p203 = por %p201, %p202
      %p204 = scmp.le.s32.totalorder 1, %s18
      %p205 = scmp.lt.s32.totalorder %s18, 3
      %p206 = pnand %p204, %p205
      %p207 = pneg %p206
      // Predicated region
      $region9: #{tpu_custom_call.1} parent=5 // pred_check
        _
      $region10: #{tpu_custom_call.1} parent=5 // pred_check_branch
        %209 = sbr.rel (%p206) target = $region12
      $region11: #{tpu_custom_call.1} parent=5 // pred_region
        %s210 = ssub.s32 %s18, 1
        // Predicated region
        $region13: #{tpu_custom_call.1} parent=11 // pred_check
          %p211 = pneg %p105
        $region14: #{tpu_custom_call.1} parent=11 // pred_check_branch
          %213 = sbr.rel (%p211) target = $region16
        $region15: #{tpu_custom_call.1} parent=11 // pred_region
          _
        $region16: #{tpu_custom_call.1} parent=11 // pred_fallthru
          _
        // Predicated region
        $region17: #{tpu_custom_call.1} parent=11 // pred_check
          %p214 = pneg %p126
        $region18: #{tpu_custom_call.1} parent=11 // pred_check_branch
          %216 = sbr.rel (%p214) target = $region20
        $region19: #{tpu_custom_call.1} parent=11 // pred_region
          _
        $region20: #{tpu_custom_call.1} parent=11 // pred_fallthru
          _
        // Predicated region
        $region21: #{tpu_custom_call.1} parent=11 // pred_check
          %p217 = pneg %p147
        $region22: #{tpu_custom_call.1} parent=11 // pred_check_branch
          %219 = sbr.rel (%p217) target = $region24
        $region23: #{tpu_custom_call.1} parent=11 // pred_region
          _
        $region24: #{tpu_custom_call.1} parent=11 // pred_fallthru
          _
        // Predicated region
        $region25: #{tpu_custom_call.1} parent=11 // pred_check
          %p220 = pneg %p168
        $region26: #{tpu_custom_call.1} parent=11 // pred_check_branch
          %222 = sbr.rel (%p220) target = $region28
        $region27: #{tpu_custom_call.1} parent=11 // pred_region
          _
        $region28: #{tpu_custom_call.1} parent=11 // pred_fallthru
          _
      $region12: #{tpu_custom_call.1} parent=5 // pred_fallthru
        _
      %p223 = scmp.lt.s32.totalorder %s18, 2
      // Predicated region
      $region29: #{tpu_custom_call.1} parent=5 // pred_check
        %p224 = pneg %p223
      $region30: #{tpu_custom_call.1} parent=5 // pred_check_branch
        %226 = sbr.rel (%p224) target = $region32
      $region31: #{tpu_custom_call.1} parent=5 // pred_region
        // Predicated region
        $region33: #{tpu_custom_call.1} parent=31 // pred_check
          %p227 = pneg %p52
        $region34: #{tpu_custom_call.1} parent=31 // pred_check_branch
          %229 = sbr.rel (%p227) target = $region36
        $region35: #{tpu_custom_call.1} parent=31 // pred_region
          %s230 = smul.u32 2, %s26
          %p231 = scmp.lt.s32.totalorder %s25, 1
          %s232 = scalar_select %p231, %s25, 1
          %p233 = scmp.lt.s32.totalorder %s230, 1
          %s234 = scalar_select %p233, %s230, 1
          %s235 = smul.addr %s232, 2
          %s236 = sadd.s32 %s234, %s235
          %s237 = smul.addr %s236, 8
          %s238 = scalar_lea.vmem %s0, %s237
          %s239 = smul.u32 2, %s26
        $region36: #{tpu_custom_call.1} parent=31 // pred_fallthru
          _
        // Predicated region
        $region37: #{tpu_custom_call.1} parent=31 // pred_check
          %p240 = pneg %p78
        $region38: #{tpu_custom_call.1} parent=31 // pred_check_branch
          %242 = sbr.rel (%p240) target = $region40
        $region39: #{tpu_custom_call.1} parent=31 // pred_region
          %s243 = sand.u32 %s68, 1
          %s244 = scalar_lea.sflag [#allocation5], %s243
          %s245 = sand.u32 %s68, 1
          %s246 = smul.addr %s245, 8
          %s247 = scalar_lea.vmem [#allocation4], %s246
          %s249 = ssub.s32 128, 128
          %250 = vsyncadd %s244, %s249
          %s251 = smul.addr %s25, 128
          %s252 = scalar_lea.hbm %s1, %s251
          %s254 = sshll.u32 %s247, 4
          %s255 = int_to_ptr.vmem [resolvable:$true] %s254
          %257 = dma.hbm_to_vmem [thread:$0]  %s252, 128, %s255, %s244
        $region40: #{tpu_custom_call.1} parent=31 // pred_fallthru
          _
      $region32: #{tpu_custom_call.1} parent=5 // pred_fallthru
        _
      %p258 = scmp.le.s32.totalorder 1, %s18
      %p259 = scmp.lt.s32.totalorder %s18, 3
      %p260 = pnand %p258, %p259
      %p261 = pneg %p260
      // Predicated region
      $region41: #{tpu_custom_call.1} parent=5 // pred_check
        _
      $region42: #{tpu_custom_call.1} parent=5 // pred_check_branch
        %263 = sbr.rel (%p260) target = $region44
      $region43: #{tpu_custom_call.1} parent=5 // pred_region
        %s264 = ssub.s32 %s18, 1
        %s265 = sand.u32 %s71, 1
        %s266 = scalar_lea.sflag [#allocation5], %s265
        %s267 = sand.u32 %s71, 1
        %s268 = smul.addr %s267, 8
        %s269 = scalar_lea.vmem [#allocation4], %s268
        // Predicated region
        $region45: #{tpu_custom_call.1} parent=43 // pred_check
          %p270 = pneg %p84
        $region46: #{tpu_custom_call.1} parent=43 // pred_check_branch
          %272 = sbr.rel (%p270) target = $region48
        $region47: #{tpu_custom_call.1} parent=43 // pred_region
          %273 = dma.done %s266, 128
        $region48: #{tpu_custom_call.1} parent=43 // pred_fallthru
          _
        %s274 = smul.u32 2, %s28
        %p275 = scmp.lt.s32.totalorder %s27, 1
        %s276 = scalar_select %p275, %s27, 1
        %p277 = scmp.lt.s32.totalorder %s274, 1
        %s278 = scalar_select %p277, %s274, 1
        %s279 = smul.addr %s276, 2
        %s280 = sadd.s32 %s278, %s279
        %s281 = smul.addr %s280, 8
        %s282 = scalar_lea.vmem %s0, %s281
        %p283 = pneg %p58
        %p284 = pneg %p55
        %s285 = sand.u32 %s71, 1
        %s286 = scalar_lea.sflag [#allocation5], %s285
        %s287 = sand.u32 %s71, 1
        %s288 = smul.addr %s287, 8
        %s289 = scalar_lea.vmem [#allocation4], %s288
        %p290 = pneg %p84
        %p291 = pneg %p81
        %p292 = pneg %p105
        %p293 = pneg %p102
        %p294 = pneg %p126
        %p295 = pneg %p123
        %p296 = pneg %p147
        %p297 = pneg %p144
        %p298 = pneg %p168
        %p299 = pneg %p165
        %p300 = pneg %p196
        %p301 = pneg %p193
        %s302 = sand.u32 %s183, 1
        %s303 = scalar_lea.sflag [#allocation6], %s302
        %s304 = sand.u32 %s183, 1
        %s305 = smul.addr %s304, 16
        %s306 = scalar_lea.vmem [#allocation7], %s305
        %s307 = smul.u32 2, %s28
        %p308 = scmp.lt.s32.totalorder %s27, 1
        %s309 = scalar_select %p308, %s27, 1
        %p310 = scmp.lt.s32.totalorder %s307, 1
        %s311 = scalar_select %p310, %s307, 1
        %s312 = smul.addr %s309, 2
        %s313 = sadd.s32 %s311, %s312
        %s314 = smul.addr %s313, 8
        %s315 = scalar_lea.vmem %s0, %s314
        %s316 = smul.u32 2, %s28
        %s317 = smul.u32 2, %s28
        %p318 = scmp.eq.s32.totalorder %s28, 0
        // Predicated region
        $region49: #{tpu_custom_call.1} parent=43 // pred_check
          %p319 = pneg %p318
        $region50: #{tpu_custom_call.1} parent=43 // pred_check_branch
          %321 = sbr.rel (%p319) target = $region52
        $region51: #{tpu_custom_call.1} parent=43 // pred_region
          %v322 = vld [vmem:[%s269] sm:$0xff]
          %v323 = vld [vmem:[%s3] sm:$0xff]
          %v324 = vld [vmem:[%s3 + $0x8] sm:$0xff]
          %v325 = vld [vmem:[%s3 + $0x10] sm:$0xff]
          %v326 = vld [vmem:[%s3 + $0x18] sm:$0xff]
          %vm327 = vcmask 261120
          %v329 = vsel %vm327, %v322, 0
          %331 = vmatprep.subr.mxu0 0.0
          %332 = vmatpush1.msra.mxu0 0.0
          %333 = vmatprep.subr.mxu0 0.0
          %334 = vmatpush1.msra.mxu0 0.0
          %335 = vmatprep.subr.mxu0 0.0
          %336 = vmatpush1.msra.mxu0 0.0
          %337 = vmatprep.subr.mxu0 0.0
          %338 = vmatpush1.msra.mxu0 0.0
          %339 = vmatprep.subr.mxu0 0.0
          %340 = vmatpush1.msra.mxu0 0.0
          %341 = vmatprep.subr.mxu0 0.0
          %342 = vmatpush1.msra.mxu0 0.0
          %343 = vmatprep.subr.mxu0 0.0
          %344 = vmatpush1.msra.mxu0 0.0
          %345 = vmatprep.subr.mxu0 0.0
          %346 = vmatpush1.msra.mxu0 0.0
          %347 = vmatprep.subr.mxu0 0.0
          %348 = vmatpush1.msra.mxu0 0.0
          %349 = vmatprep.subr.mxu0 0.0
          %350 = vmatpush1.msra.mxu0 0.0
          %351 = vmatprep.subr.mxu0 0.0
          %352 = vmatpush1.msra.mxu0 0.0
          %353 = vmatprep.subr.mxu0 0.0
          %354 = vmatpush1.msra.mxu0 0.0
          %355 = vmatprep.subr.mxu0 0.0
          %356 = vmatpush1.msra.mxu0 %v326
          %357 = vmatprep.subr.mxu0 0.0
          %358 = vmatpush1.msra.mxu0 %v325
          %359 = vmatprep.subr.mxu0 0.0
          %360 = vmatpush1.msra.mxu0 %v324
          %361 = vmatprep.subr.mxu0 0.0
          %362 = vmatpush1.msra.mxu0 %v323
          %363 = vmatprep.subr.mxu0 0.0
          %364 = vmatpush2.msra.mxu0 0.0
          %365 = vmatprep.subr.mxu0 0.0
          %366 = vmatpush2.msra.mxu0 0.0
          %367 = vmatprep.subr.mxu0 0.0
          %368 = vmatpush2.msra.mxu0 0.0
          %369 = vmatprep.subr.mxu0 0.0
          %370 = vmatpush2.msra.mxu0 0.0
          %371 = vmatprep.subr.mxu0 0.0
          %372 = vmatpush2.msra.mxu0 0.0
          %373 = vmatprep.subr.mxu0 0.0
          %374 = vmatpush2.msra.mxu0 0.0
          %375 = vmatprep.subr.mxu0 0.0
          %376 = vmatpush2.msra.mxu0 0.0
          %377 = vmatprep.subr.mxu0 0.0
          %378 = vmatpush2.msra.mxu0 0.0
          %379 = vmatprep.subr.mxu0 0.0
          %380 = vmatpush2.msra.mxu0 0.0
          %381 = vmatprep.subr.mxu0 0.0
          %382 = vmatpush2.msra.mxu0 0.0
          %383 = vmatprep.subr.mxu0 0.0
          %384 = vmatpush2.msra.mxu0 0.0
          %385 = vmatprep.subr.mxu0 0.0
          %386 = vmatpush2.msra.mxu0 0.0
          %387 = vmatprep.subr.mxu0 0.0
          %388 = vmatpush2.msra.mxu0 0.0
          %389 = vmatprep.subr.mxu0 0.0
          %390 = vmatpush2.msra.mxu0 0.0
          %391 = vmatprep.subr.mxu0 0.0
          %392 = vmatpush2.msra.mxu0 0.0
          %393 = vmatprep.subr.mxu0 0.0
          %394 = vmatpush2.msra.mxu0 0.0
          %395 = vmatprep.mubr.f32.mxu0 0.0
          %396 = vmatmul.mubr.f32.gmra.mxu0 %v329
          %v397 = vpop.f32.mrf.mxu0
          %v398 = vadd.f32 0.0, %v397
          %v399 = vpop.f32.mrf.mxu0
          %400 = vdwg.mxu0
          %401 = vst [vmem:[#allocation2] sm:$0xff] %v398
        $region52: #{tpu_custom_call.1} parent=43 // pred_fallthru
          _
        %v402 = vld [vmem:[%s315] sm:$0xff]
        %v403 = vld [vmem:[%s315 + $0x8] sm:$0xff]
        %v404 = vld [vmem:[%s2] sm:$0xff]
        %v405 = vld [vmem:[%s2 + $0x8] sm:$0xff]
        %v406 = vld [vmem:[%s2 + $0x10] sm:$0xff]
        %v407 = vld [vmem:[%s2 + $0x18] sm:$0xff]
        %vm408 = vcmask 261120
        %v410 = vsel %vm408, %v402, 0
        %v413 = vsel %vm408, %v403, 0
        %415 = vmatprep.subr.mxu0 0.0
        %416 = vmatpush1.msra.mxu0 0.0
        %417 = vmatprep.subr.mxu0 0.0
        %418 = vmatpush1.msra.mxu0 0.0
        %419 = vmatprep.subr.mxu0 0.0
        %420 = vmatpush1.msra.mxu0 0.0
        %421 = vmatprep.subr.mxu0 0.0
        %422 = vmatpush1.msra.mxu0 0.0
        %423 = vmatprep.subr.mxu0 0.0
        %424 = vmatpush1.msra.mxu0 0.0
        %425 = vmatprep.subr.mxu0 0.0
        %426 = vmatpush1.msra.mxu0 0.0
        %427 = vmatprep.subr.mxu0 0.0
        %428 = vmatpush1.msra.mxu0 0.0
        %429 = vmatprep.subr.mxu0 0.0
        %430 = vmatpush1.msra.mxu0 0.0
        %431 = vmatprep.subr.mxu0 0.0
        %432 = vmatpush1.msra.mxu0 0.0
        %433 = vmatprep.subr.mxu0 0.0
        %434 = vmatpush1.msra.mxu0 0.0
        %435 = vmatprep.subr.mxu0 0.0
        %436 = vmatpush1.msra.mxu0 0.0
        %437 = vmatprep.subr.mxu0 0.0
        %438 = vmatpush1.msra.mxu0 0.0
        %439 = vmatprep.subr.mxu0 0.0
        %440 = vmatpush1.msra.mxu0 %v407
        %441 = vmatprep.subr.mxu0 0.0
        %442 = vmatpush1.msra.mxu0 %v406
        %443 = vmatprep.subr.mxu0 0.0
        %444 = vmatpush1.msra.mxu0 %v405
        %445 = vmatprep.subr.mxu0 0.0
        %446 = vmatpush1.msra.mxu0 %v404
        %447 = vmatprep.subr.mxu0 0.0
        %448 = vmatpush2.msra.mxu0 0.0
        %449 = vmatprep.subr.mxu0 0.0
        %450 = vmatpush2.msra.mxu0 0.0
        %451 = vmatprep.subr.mxu0 0.0
        %452 = vmatpush2.msra.mxu0 0.0
        %453 = vmatprep.subr.mxu0 0.0
        %454 = vmatpush2.msra.mxu0 0.0
        %455 = vmatprep.subr.mxu0 0.0
        %456 = vmatpush2.msra.mxu0 0.0
        %457 = vmatprep.subr.mxu0 0.0
        %458 = vmatpush2.msra.mxu0 0.0
        %459 = vmatprep.subr.mxu0 0.0
        %460 = vmatpush2.msra.mxu0 0.0
        %461 = vmatprep.subr.mxu0 0.0
        %462 = vmatpush2.msra.mxu0 0.0
        %463 = vmatprep.subr.mxu0 0.0
        %464 = vmatpush2.msra.mxu0 0.0
        %465 = vmatprep.subr.mxu0 0.0
        %466 = vmatpush2.msra.mxu0 0.0
        %467 = vmatprep.subr.mxu0 0.0
        %468 = vmatpush2.msra.mxu0 0.0
        %469 = vmatprep.subr.mxu0 0.0
        %470 = vmatpush2.msra.mxu0 0.0
        %471 = vmatprep.subr.mxu0 0.0
        %472 = vmatpush2.msra.mxu0 0.0
        %473 = vmatprep.subr.mxu0 0.0
        %474 = vmatpush2.msra.mxu0 0.0
        %475 = vmatprep.subr.mxu0 0.0
        %476 = vmatpush2.msra.mxu0 0.0
        %477 = vmatprep.subr.mxu0 0.0
        %478 = vmatpush2.msra.mxu0 0.0
        %479 = vmatprep.mubr.f32.mxu0 0.0
        %480 = vmatmul.mubr.f32.gmra.mxu0 %v410
        %v481 = vpop.f32.mrf.mxu0
        %v482 = vadd.f32 0.0, %v481
        %v483 = vpop.f32.mrf.mxu0
        %484 = vmatprep.mubr.f32.mxu0 0.0
        %485 = vmatmul.mubr.f32.gmra.mxu0 %v413
        %v486 = vpop.f32.mrf.mxu0
        %v487 = vadd.f32 0.0, %v486
        %v488 = vpop.f32.mrf.mxu0
        %489 = vdwg.mxu0
        %v490 = vmul.f32 %v482, 0.25
        %v491 = vmul.f32 %v487, 0.25
        %v492 = vld [vmem:[#allocation2] sm:$0xff]
        %vm493 = vcmask 130048
        %v495 = vsel %vm493, %v490, 0
        %v498 = vsel %vm493, %v491, 0
        %v501 = vsel %vm493, %v492, 0
        %503 = vmatprep.subr.mxu0 0.0
        %504 = vmatpush1.xpose.msra.mxu0 0.0
        %505 = vmatprep.subr.mxu0 0.0
        %506 = vmatpush1.xpose.msra.mxu0 0.0
        %507 = vmatprep.subr.mxu0 0.0
        %508 = vmatpush1.xpose.msra.mxu0 0.0
        %509 = vmatprep.subr.mxu0 0.0
        %510 = vmatpush1.xpose.msra.mxu0 0.0
        %511 = vmatprep.subr.mxu0 0.0
        %512 = vmatpush1.xpose.msra.mxu0 0.0
        %513 = vmatprep.subr.mxu0 0.0
        %514 = vmatpush1.xpose.msra.mxu0 0.0
        %515 = vmatprep.subr.mxu0 0.0
        %516 = vmatpush1.xpose.msra.mxu0 0.0
        %517 = vmatprep.subr.mxu0 0.0
        %518 = vmatpush1.xpose.msra.mxu0 0.0
        %519 = vmatprep.subr.mxu0 0.0
        %520 = vmatpush1.xpose.msra.mxu0 0.0
        %521 = vmatprep.subr.mxu0 0.0
        %522 = vmatpush1.xpose.msra.mxu0 0.0
        %523 = vmatprep.subr.mxu0 0.0
        %524 = vmatpush1.xpose.msra.mxu0 0.0
        %525 = vmatprep.subr.mxu0 0.0
        %526 = vmatpush1.xpose.msra.mxu0 0.0
        %527 = vmatprep.subr.mxu0 0.0
        %528 = vmatpush1.xpose.msra.mxu0 0.0
        %529 = vmatprep.subr.mxu0 0.0
        %530 = vmatpush1.xpose.msra.mxu0 0.0
        %531 = vmatprep.subr.mxu0 0.0
        %532 = vmatpush1.xpose.msra.mxu0 0.0
        %533 = vmatprep.subr.mxu0 0.0
        %534 = vmatpush1.xpose.msra.mxu0 %v501
        %535 = vmatprep.subr.mxu0 0.0
        %536 = vmatpush2.xpose.msra.mxu0 0.0
        %537 = vmatprep.subr.mxu0 0.0
        %538 = vmatpush2.xpose.msra.mxu0 0.0
        %539 = vmatprep.subr.mxu0 0.0
        %540 = vmatpush2.xpose.msra.mxu0 0.0
        %541 = vmatprep.subr.mxu0 0.0
        %542 = vmatpush2.xpose.msra.mxu0 0.0
        %543 = vmatprep.subr.mxu0 0.0
        %544 = vmatpush2.xpose.msra.mxu0 0.0
        %545 = vmatprep.subr.mxu0 0.0
        %546 = vmatpush2.xpose.msra.mxu0 0.0
        %547 = vmatprep.subr.mxu0 0.0
        %548 = vmatpush2.xpose.msra.mxu0 0.0
        %549 = vmatprep.subr.mxu0 0.0
        %550 = vmatpush2.xpose.msra.mxu0 0.0
        %551 = vmatprep.subr.mxu0 0.0
        %552 = vmatpush2.xpose.msra.mxu0 0.0
        %553 = vmatprep.subr.mxu0 0.0
        %554 = vmatpush2.xpose.msra.mxu0 0.0
        %555 = vmatprep.subr.mxu0 0.0
        %556 = vmatpush2.xpose.msra.mxu0 0.0
        %557 = vmatprep.subr.mxu0 0.0
        %558 = vmatpush2.xpose.msra.mxu0 0.0
        %559 = vmatprep.subr.mxu0 0.0
        %560 = vmatpush2.xpose.msra.mxu0 0.0
        %561 = vmatprep.subr.mxu0 0.0
        %562 = vmatpush2.xpose.msra.mxu0 0.0
        %563 = vmatprep.subr.mxu0 0.0
        %564 = vmatpush2.xpose.msra.mxu0 0.0
        %565 = vmatprep.subr.mxu0 0.0
        %566 = vmatpush2.xpose.msra.mxu0 0.0
        %567 = vmatprep.mubr.f32.mxu0 0.0
        %568 = vmatmul.mubr.f32.gmra.mxu0 %v495
        %v569 = vpop.f32.mrf.mxu0
        %v570 = vadd.f32 0.0, %v569
        %v571 = vpop.f32.mrf.mxu0
        %572 = vmatprep.mubr.f32.mxu0 0.0
        %573 = vmatmul.mubr.f32.gmra.mxu0 %v498
        %v574 = vpop.f32.mrf.mxu0
        %v575 = vadd.f32 0.0, %v574
        %v576 = vpop.f32.mrf.mxu0
        %577 = vdwg.mxu0
        %vm578 = vcmask 64512
        %v579 = vsel %vm578, %v570, -inf
        %580 = vmax.xlane.f32.xlu0 %v579
        %v581 = vpop.xlane.xlu0 %580
        %v582 = vsel %vm578, %v575, -inf
        %583 = vmax.xlane.f32.xlu0 %v582
        %v584 = vpop.xlane.xlu0 %583
        %v585 = vsub.f32 %v570, %v581
        %v586 = vsub.f32 %v575, %v584
        %v587 = vmul.f32 %v585, 1.442695
        %v588 = vpow.pop %v587
        %v589 = vmul.f32 %v586, 1.442695
        %v590 = vpow.pop %v589
        %v591 = vsel %vm578, %v588, 0.0
        %592 = vadd.xlane.f32.xlu0 %v591
        %v593 = vpop.xlane.xlu0 %592
        %v594 = vsel %vm578, %v590, 0.0
        %595 = vadd.xlane.f32.xlu0 %v594
        %v596 = vpop.xlane.xlu0 %595
        %597 = vrot.lane.b32.xlu0 %v492, 64
        %v598 = vpop.permute.xlu0 %597
        %v601 = vsel %vm578, %v588, 0
        %v604 = vsel %vm578, %v590, 0
        %606 = vmatprep.subr.mxu0 0.0
        %607 = vmatpush1.msra.mxu0 0.0
        %608 = vmatprep.subr.mxu0 0.0
        %609 = vmatpush1.msra.mxu0 0.0
        %610 = vmatprep.subr.mxu0 0.0
        %611 = vmatpush1.msra.mxu0 0.0
        %612 = vmatprep.subr.mxu0 0.0
        %613 = vmatpush1.msra.mxu0 0.0
        %614 = vmatprep.subr.mxu0 0.0
        %615 = vmatpush1.msra.mxu0 0.0
        %616 = vmatprep.subr.mxu0 0.0
        %617 = vmatpush1.msra.mxu0 0.0
        %618 = vmatprep.subr.mxu0 0.0
        %619 = vmatpush1.msra.mxu0 0.0
        %620 = vmatprep.subr.mxu0 0.0
        %621 = vmatpush1.msra.mxu0 0.0
        %622 = vmatprep.subr.mxu0 0.0
        %623 = vmatpush1.msra.mxu0 0.0
        %624 = vmatprep.subr.mxu0 0.0
        %625 = vmatpush1.msra.mxu0 0.0
        %626 = vmatprep.subr.mxu0 0.0
        %627 = vmatpush1.msra.mxu0 0.0
        %628 = vmatprep.subr.mxu0 0.0
        %629 = vmatpush1.msra.mxu0 0.0
        %630 = vmatprep.subr.mxu0 0.0
        %631 = vmatpush1.msra.mxu0 0.0
        %632 = vmatprep.subr.mxu0 0.0
        %633 = vmatpush1.msra.mxu0 0.0
        %634 = vmatprep.subr.mxu0 0.0
        %635 = vmatpush1.msra.mxu0 0.0
        %636 = vmatprep.subr.mxu0 0.0
        %637 = vmatpush1.msra.mxu0 %v598
        %638 = vmatprep.subr.mxu0 0.0
        %639 = vmatpush2.msra.mxu0 0.0
        %640 = vmatprep.subr.mxu0 0.0
        %641 = vmatpush2.msra.mxu0 0.0
        %642 = vmatprep.subr.mxu0 0.0
        %643 = vmatpush2.msra.mxu0 0.0
        %644 = vmatprep.subr.mxu0 0.0
        %645 = vmatpush2.msra.mxu0 0.0
        %646 = vmatprep.subr.mxu0 0.0
        %647 = vmatpush2.msra.mxu0 0.0
        %648 = vmatprep.subr.mxu0 0.0
        %649 = vmatpush2.msra.mxu0 0.0
        %650 = vmatprep.subr.mxu0 0.0
        %651 = vmatpush2.msra.mxu0 0.0
        %652 = vmatprep.subr.mxu0 0.0
        %653 = vmatpush2.msra.mxu0 0.0
        %654 = vmatprep.subr.mxu0 0.0
        %655 = vmatpush2.msra.mxu0 0.0
        %656 = vmatprep.subr.mxu0 0.0
        %657 = vmatpush2.msra.mxu0 0.0
        %658 = vmatprep.subr.mxu0 0.0
        %659 = vmatpush2.msra.mxu0 0.0
        %660 = vmatprep.subr.mxu0 0.0
        %661 = vmatpush2.msra.mxu0 0.0
        %662 = vmatprep.subr.mxu0 0.0
        %663 = vmatpush2.msra.mxu0 0.0
        %664 = vmatprep.subr.mxu0 0.0
        %665 = vmatpush2.msra.mxu0 0.0
        %666 = vmatprep.subr.mxu0 0.0
        %667 = vmatpush2.msra.mxu0 0.0
        %668 = vmatprep.subr.mxu0 0.0
        %669 = vmatpush2.msra.mxu0 0.0
        %670 = vmatprep.mubr.f32.mxu0 0.0
        %671 = vmatmul.mubr.f32.gmra.mxu0 %v601
        %v672 = vpop.f32.mrf.mxu0
        %v673 = vadd.f32 0.0, %v672
        %v674 = vpop.f32.mrf.mxu0
        %675 = vmatprep.mubr.f32.mxu0 0.0
        %676 = vmatmul.mubr.f32.gmra.mxu0 %v604
        %v677 = vpop.f32.mrf.mxu0
        %v678 = vadd.f32 0.0, %v677
        %v679 = vpop.f32.mrf.mxu0
        %680 = vdwg.mxu0
        %v681 = vrcp.pop %v593
        %v682 = vrcp.pop %v596
        %v683 = vmul.f32 %v673, %v681
        %v684 = vmul.f32 %v678, %v682
        %685 = vst.msk [vmem:[#allocation3] sm:$0xff] %vm493, %v683
        %686 = vst.msk [vmem:[#allocation3 + $0x8] sm:$0xff] %vm493, %v684
        %v687 = vld [vmem:[#allocation2] sm:$0xff]
        %688 = vrot.lane.b32.xlu0 %v490, 112
        %v689 = vpop.permute.xlu0 %688
        %690 = vrot.lane.b32.xlu0 %v491, 112
        %v691 = vpop.permute.xlu0 %690
        %693 = vrot.lane.b32.xlu0 %v687, 112
        %v694 = vpop.permute.xlu0 %693
        %v695 = vsel %vm493, %v689, 0
        %v697 = vsel %vm493, %v691, 0
        %v699 = vsel %vm493, %v694, 0
        %701 = vmatprep.subr.mxu0 0.0
        %702 = vmatpush1.xpose.msra.mxu0 0.0
        %703 = vmatprep.subr.mxu0 0.0
        %704 = vmatpush1.xpose.msra.mxu0 0.0
        %705 = vmatprep.subr.mxu0 0.0
        %706 = vmatpush1.xpose.msra.mxu0 0.0
        %707 = vmatprep.subr.mxu0 0.0
        %708 = vmatpush1.xpose.msra.mxu0 0.0
        %709 = vmatprep.subr.mxu0 0.0
        %710 = vmatpush1.xpose.msra.mxu0 0.0
        %711 = vmatprep.subr.mxu0 0.0
        %712 = vmatpush1.xpose.msra.mxu0 0.0
        %713 = vmatprep.subr.mxu0 0.0
        %714 = vmatpush1.xpose.msra.mxu0 0.0
        %715 = vmatprep.subr.mxu0 0.0
        %716 = vmatpush1.xpose.msra.mxu0 0.0
        %717 = vmatprep.subr.mxu0 0.0
        %718 = vmatpush1.xpose.msra.mxu0 0.0
        %719 = vmatprep.subr.mxu0 0.0
        %720 = vmatpush1.xpose.msra.mxu0 0.0
        %721 = vmatprep.subr.mxu0 0.0
        %722 = vmatpush1.xpose.msra.mxu0 0.0
        %723 = vmatprep.subr.mxu0 0.0
        %724 = vmatpush1.xpose.msra.mxu0 0.0
        %725 = vmatprep.subr.mxu0 0.0
        %726 = vmatpush1.xpose.msra.mxu0 0.0
        %727 = vmatprep.subr.mxu0 0.0
        %728 = vmatpush1.xpose.msra.mxu0 0.0
        %729 = vmatprep.subr.mxu0 0.0
        %730 = vmatpush1.xpose.msra.mxu0 0.0
        %731 = vmatprep.subr.mxu0 0.0
        %732 = vmatpush1.xpose.msra.mxu0 %v699
        %733 = vmatprep.subr.mxu0 0.0
        %734 = vmatpush2.xpose.msra.mxu0 0.0
        %735 = vmatprep.subr.mxu0 0.0
        %736 = vmatpush2.xpose.msra.mxu0 0.0
        %737 = vmatprep.subr.mxu0 0.0
        %738 = vmatpush2.xpose.msra.mxu0 0.0
        %739 = vmatprep.subr.mxu0 0.0
        %740 = vmatpush2.xpose.msra.mxu0 0.0
        %741 = vmatprep.subr.mxu0 0.0
        %742 = vmatpush2.xpose.msra.mxu0 0.0
        %743 = vmatprep.subr.mxu0 0.0
        %744 = vmatpush2.xpose.msra.mxu0 0.0
        %745 = vmatprep.subr.mxu0 0.0
        %746 = vmatpush2.xpose.msra.mxu0 0.0
        %747 = vmatprep.subr.mxu0 0.0
        %748 = vmatpush2.xpose.msra.mxu0 0.0
        %749 = vmatprep.subr.mxu0 0.0
        %750 = vmatpush2.xpose.msra.mxu0 0.0
        %751 = vmatprep.subr.mxu0 0.0
        %752 = vmatpush2.xpose.msra.mxu0 0.0
        %753 = vmatprep.subr.mxu0 0.0
        %754 = vmatpush2.xpose.msra.mxu0 0.0
        %755 = vmatprep.subr.mxu0 0.0
        %756 = vmatpush2.xpose.msra.mxu0 0.0
        %757 = vmatprep.subr.mxu0 0.0
        %758 = vmatpush2.xpose.msra.mxu0 0.0
        %759 = vmatprep.subr.mxu0 0.0
        %760 = vmatpush2.xpose.msra.mxu0 0.0
        %761 = vmatprep.subr.mxu0 0.0
        %762 = vmatpush2.xpose.msra.mxu0 0.0
        %763 = vmatprep.subr.mxu0 0.0
        %764 = vmatpush2.xpose.msra.mxu0 0.0
        %765 = vmatprep.mubr.f32.mxu0 0.0
        %766 = vmatmul.mubr.f32.gmra.mxu0 %v695
        %v767 = vpop.f32.mrf.mxu0
        %v768 = vadd.f32 0.0, %v767
        %v769 = vpop.f32.mrf.mxu0
        %770 = vmatprep.mubr.f32.mxu0 0.0
        %771 = vmatmul.mubr.f32.gmra.mxu0 %v697
        %v772 = vpop.f32.mrf.mxu0
        %v773 = vadd.f32 0.0, %v772
        %v774 = vpop.f32.mrf.mxu0
        %775 = vdwg.mxu0
        %v776 = vsel %vm578, %v768, -inf
        %777 = vmax.xlane.f32.xlu0 %v776
        %v778 = vpop.xlane.xlu0 %777
        %v779 = vsel %vm578, %v773, -inf
        %780 = vmax.xlane.f32.xlu0 %v779
        %v781 = vpop.xlane.xlu0 %780
        %v782 = vsub.f32 %v768, %v778
        %v783 = vsub.f32 %v773, %v781
        %v784 = vmul.f32 %v782, 1.442695
        %v785 = vpow.pop %v784
        %v786 = vmul.f32 %v783, 1.442695
        %v787 = vpow.pop %v786
        %v788 = vsel %vm578, %v785, 0.0
        %789 = vadd.xlane.f32.xlu0 %v788
        %v790 = vpop.xlane.xlu0 %789
        %v791 = vsel %vm578, %v787, 0.0
        %792 = vadd.xlane.f32.xlu0 %v791
        %v793 = vpop.xlane.xlu0 %792
        %794 = vrot.lane.b32.xlu0 %v687, 48
        %v795 = vpop.permute.xlu0 %794
        %v798 = vsel %vm578, %v785, 0
        %v801 = vsel %vm578, %v787, 0
        %803 = vmatprep.subr.mxu0 0.0
        %804 = vmatpush1.msra.mxu0 0.0
        %805 = vmatprep.subr.mxu0 0.0
        %806 = vmatpush1.msra.mxu0 0.0
        %807 = vmatprep.subr.mxu0 0.0
        %808 = vmatpush1.msra.mxu0 0.0
        %809 = vmatprep.subr.mxu0 0.0
        %810 = vmatpush1.msra.mxu0 0.0
        %811 = vmatprep.subr.mxu0 0.0
        %812 = vmatpush1.msra.mxu0 0.0
        %813 = vmatprep.subr.mxu0 0.0
        %814 = vmatpush1.msra.mxu0 0.0
        %815 = vmatprep.subr.mxu0 0.0
        %816 = vmatpush1.msra.mxu0 0.0
        %817 = vmatprep.subr.mxu0 0.0
        %818 = vmatpush1.msra.mxu0 0.0
        %819 = vmatprep.subr.mxu0 0.0
        %820 = vmatpush1.msra.mxu0 0.0
        %821 = vmatprep.subr.mxu0 0.0
        %822 = vmatpush1.msra.mxu0 0.0
        %823 = vmatprep.subr.mxu0 0.0
        %824 = vmatpush1.msra.mxu0 0.0
        %825 = vmatprep.subr.mxu0 0.0
        %826 = vmatpush1.msra.mxu0 0.0
        %827 = vmatprep.subr.mxu0 0.0
        %828 = vmatpush1.msra.mxu0 0.0
        %829 = vmatprep.subr.mxu0 0.0
        %830 = vmatpush1.msra.mxu0 0.0
        %831 = vmatprep.subr.mxu0 0.0
        %832 = vmatpush1.msra.mxu0 0.0
        %833 = vmatprep.subr.mxu0 0.0
        %834 = vmatpush1.msra.mxu0 %v795
        %835 = vmatprep.subr.mxu0 0.0
        %836 = vmatpush2.msra.mxu0 0.0
        %837 = vmatprep.subr.mxu0 0.0
        %838 = vmatpush2.msra.mxu0 0.0
        %839 = vmatprep.subr.mxu0 0.0
        %840 = vmatpush2.msra.mxu0 0.0
        %841 = vmatprep.subr.mxu0 0.0
        %842 = vmatpush2.msra.mxu0 0.0
        %843 = vmatprep.subr.mxu0 0.0
        %844 = vmatpush2.msra.mxu0 0.0
        %845 = vmatprep.subr.mxu0 0.0
        %846 = vmatpush2.msra.mxu0 0.0
        %847 = vmatprep.subr.mxu0 0.0
        %848 = vmatpush2.msra.mxu0 0.0
        %849 = vmatprep.subr.mxu0 0.0
        %850 = vmatpush2.msra.mxu0 0.0
        %851 = vmatprep.subr.mxu0 0.0
        %852 = vmatpush2.msra.mxu0 0.0
        %853 = vmatprep.subr.mxu0 0.0
        %854 = vmatpush2.msra.mxu0 0.0
        %855 = vmatprep.subr.mxu0 0.0
        %856 = vmatpush2.msra.mxu0 0.0
        %857 = vmatprep.subr.mxu0 0.0
        %858 = vmatpush2.msra.mxu0 0.0
        %859 = vmatprep.subr.mxu0 0.0
        %860 = vmatpush2.msra.mxu0 0.0
        %861 = vmatprep.subr.mxu0 0.0
        %862 = vmatpush2.msra.mxu0 0.0
        %863 = vmatprep.subr.mxu0 0.0
        %864 = vmatpush2.msra.mxu0 0.0
        %865 = vmatprep.subr.mxu0 0.0
        %866 = vmatpush2.msra.mxu0 0.0
        %867 = vmatprep.mubr.f32.mxu0 0.0
        %868 = vmatmul.mubr.f32.gmra.mxu0 %v798
        %v869 = vpop.f32.mrf.mxu0
        %v870 = vadd.f32 0.0, %v869
        %v871 = vpop.f32.mrf.mxu0
        %872 = vmatprep.mubr.f32.mxu0 0.0
        %873 = vmatmul.mubr.f32.gmra.mxu0 %v801
        %v874 = vpop.f32.mrf.mxu0
        %v875 = vadd.f32 0.0, %v874
        %v876 = vpop.f32.mrf.mxu0
        %877 = vdwg.mxu0
        %v878 = vrcp.pop %v790
        %v879 = vrcp.pop %v793
        %v880 = vmul.f32 %v870, %v878
        %v881 = vmul.f32 %v875, %v879
        %884 = vrot.lane.b32.xlu0 %v880, 16
        %v885 = vpop.permute.xlu0 %884
        %886 = vrot.lane.b32.xlu0 %v881, 16
        %v887 = vpop.permute.xlu0 %886
        %vm890 = vcmask 261248
        %891 = vst.msk [vmem:[#allocation3] sm:$0xff] %vm890, %v885
        %892 = vst.msk [vmem:[#allocation3 + $0x8] sm:$0xff] %vm890, %v887
        %v893 = vld [vmem:[#allocation2] sm:$0xff]
        %894 = vrot.lane.b32.xlu0 %v490, 96
        %v895 = vpop.permute.xlu0 %894
        %896 = vrot.lane.b32.xlu0 %v491, 96
        %v897 = vpop.permute.xlu0 %896
        %899 = vrot.lane.b32.xlu0 %v893, 96
        %v900 = vpop.permute.xlu0 %899
        %v901 = vsel %vm493, %v895, 0
        %v903 = vsel %vm493, %v897, 0
        %v905 = vsel %vm493, %v900, 0
        %907 = vmatprep.subr.mxu0 0.0
        %908 = vmatpush1.xpose.msra.mxu0 0.0
        %909 = vmatprep.subr.mxu0 0.0
        %910 = vmatpush1.xpose.msra.mxu0 0.0
        %911 = vmatprep.subr.mxu0 0.0
        %912 = vmatpush1.xpose.msra.mxu0 0.0
        %913 = vmatprep.subr.mxu0 0.0
        %914 = vmatpush1.xpose.msra.mxu0 0.0
        %915 = vmatprep.subr.mxu0 0.0
        %916 = vmatpush1.xpose.msra.mxu0 0.0
        %917 = vmatprep.subr.mxu0 0.0
        %918 = vmatpush1.xpose.msra.mxu0 0.0
        %919 = vmatprep.subr.mxu0 0.0
        %920 = vmatpush1.xpose.msra.mxu0 0.0
        %921 = vmatprep.subr.mxu0 0.0
        %922 = vmatpush1.xpose.msra.mxu0 0.0
        %923 = vmatprep.subr.mxu0 0.0
        %924 = vmatpush1.xpose.msra.mxu0 0.0
        %925 = vmatprep.subr.mxu0 0.0
        %926 = vmatpush1.xpose.msra.mxu0 0.0
        %927 = vmatprep.subr.mxu0 0.0
        %928 = vmatpush1.xpose.msra.mxu0 0.0
        %929 = vmatprep.subr.mxu0 0.0
        %930 = vmatpush1.xpose.msra.mxu0 0.0
        %931 = vmatprep.subr.mxu0 0.0
        %932 = vmatpush1.xpose.msra.mxu0 0.0
        %933 = vmatprep.subr.mxu0 0.0
        %934 = vmatpush1.xpose.msra.mxu0 0.0
        %935 = vmatprep.subr.mxu0 0.0
        %936 = vmatpush1.xpose.msra.mxu0 0.0
        %937 = vmatprep.subr.mxu0 0.0
        %938 = vmatpush1.xpose.msra.mxu0 %v905
        %939 = vmatprep.subr.mxu0 0.0
        %940 = vmatpush2.xpose.msra.mxu0 0.0
        %941 = vmatprep.subr.mxu0 0.0
        %942 = vmatpush2.xpose.msra.mxu0 0.0
        %943 = vmatprep.subr.mxu0 0.0
        %944 = vmatpush2.xpose.msra.mxu0 0.0
        %945 = vmatprep.subr.mxu0 0.0
        %946 = vmatpush2.xpose.msra.mxu0 0.0
        %947 = vmatprep.subr.mxu0 0.0
        %948 = vmatpush2.xpose.msra.mxu0 0.0
        %949 = vmatprep.subr.mxu0 0.0
        %950 = vmatpush2.xpose.msra.mxu0 0.0
        %951 = vmatprep.subr.mxu0 0.0
        %952 = vmatpush2.xpose.msra.mxu0 0.0
        %953 = vmatprep.subr.mxu0 0.0
        %954 = vmatpush2.xpose.msra.mxu0 0.0
        %955 = vmatprep.subr.mxu0 0.0
        %956 = vmatpush2.xpose.msra.mxu0 0.0
        %957 = vmatprep.subr.mxu0 0.0
        %958 = vmatpush2.xpose.msra.mxu0 0.0
        %959 = vmatprep.subr.mxu0 0.0
        %960 = vmatpush2.xpose.msra.mxu0 0.0
        %961 = vmatprep.subr.mxu0 0.0
        %962 = vmatpush2.xpose.msra.mxu0 0.0
        %963 = vmatprep.subr.mxu0 0.0
        %964 = vmatpush2.xpose.msra.mxu0 0.0
        %965 = vmatprep.subr.mxu0 0.0
        %966 = vmatpush2.xpose.msra.mxu0 0.0
        %967 = vmatprep.subr.mxu0 0.0
        %968 = vmatpush2.xpose.msra.mxu0 0.0
        %969 = vmatprep.subr.mxu0 0.0
        %970 = vmatpush2.xpose.msra.mxu0 0.0
        %971 = vmatprep.mubr.f32.mxu0 0.0
        %972 = vmatmul.mubr.f32.gmra.mxu0 %v901
        %v973 = vpop.f32.mrf.mxu0
        %v974 = vadd.f32 0.0, %v973
        %v975 = vpop.f32.mrf.mxu0
        %976 = vmatprep.mubr.f32.mxu0 0.0
        %977 = vmatmul.mubr.f32.gmra.mxu0 %v903
        %v978 = vpop.f32.mrf.mxu0
        %v979 = vadd.f32 0.0, %v978
        %v980 = vpop.f32.mrf.mxu0
        %981 = vdwg.mxu0
        %v982 = vsel %vm578, %v974, -inf
        %983 = vmax.xlane.f32.xlu0 %v982
        %v984 = vpop.xlane.xlu0 %983
        %v985 = vsel %vm578, %v979, -inf
        %986 = vmax.xlane.f32.xlu0 %v985
        %v987 = vpop.xlane.xlu0 %986
        %v988 = vsub.f32 %v974, %v984
        %v989 = vsub.f32 %v979, %v987
        %v990 = vmul.f32 %v988, 1.442695
        %v991 = vpow.pop %v990
        %v992 = vmul.f32 %v989, 1.442695
        %v993 = vpow.pop %v992
        %v994 = vsel %vm578, %v991, 0.0
        %995 = vadd.xlane.f32.xlu0 %v994
        %v996 = vpop.xlane.xlu0 %995
        %v997 = vsel %vm578, %v993, 0.0
        %998 = vadd.xlane.f32.xlu0 %v997
        %v999 = vpop.xlane.xlu0 %998
        %1000 = vrot.lane.b32.xlu0 %v893, 32
        %v1001 = vpop.permute.xlu0 %1000
        %v1004 = vsel %vm578, %v991, 0
        %v1007 = vsel %vm578, %v993, 0
        %1009 = vmatprep.subr.mxu0 0.0
        %1010 = vmatpush1.msra.mxu0 0.0
        %1011 = vmatprep.subr.mxu0 0.0
        %1012 = vmatpush1.msra.mxu0 0.0
        %1013 = vmatprep.subr.mxu0 0.0
        %1014 = vmatpush1.msra.mxu0 0.0
        %1015 = vmatprep.subr.mxu0 0.0
        %1016 = vmatpush1.msra.mxu0 0.0
        %1017 = vmatprep.subr.mxu0 0.0
        %1018 = vmatpush1.msra.mxu0 0.0
        %1019 = vmatprep.subr.mxu0 0.0
        %1020 = vmatpush1.msra.mxu0 0.0
        %1021 = vmatprep.subr.mxu0 0.0
        %1022 = vmatpush1.msra.mxu0 0.0
        %1023 = vmatprep.subr.mxu0 0.0
        %1024 = vmatpush1.msra.mxu0 0.0
        %1025 = vmatprep.subr.mxu0 0.0
        %1026 = vmatpush1.msra.mxu0 0.0
        %1027 = vmatprep.subr.mxu0 0.0
        %1028 = vmatpush1.msra.mxu0 0.0
        %1029 = vmatprep.subr.mxu0 0.0
        %1030 = vmatpush1.msra.mxu0 0.0
        %1031 = vmatprep.subr.mxu0 0.0
        %1032 = vmatpush1.msra.mxu0 0.0
        %1033 = vmatprep.subr.mxu0 0.0
        %1034 = vmatpush1.msra.mxu0 0.0
        %1035 = vmatprep.subr.mxu0 0.0
        %1036 = vmatpush1.msra.mxu0 0.0
        %1037 = vmatprep.subr.mxu0 0.0
        %1038 = vmatpush1.msra.mxu0 0.0
        %1039 = vmatprep.subr.mxu0 0.0
        %1040 = vmatpush1.msra.mxu0 %v1001
        %1041 = vmatprep.subr.mxu0 0.0
        %1042 = vmatpush2.msra.mxu0 0.0
        %1043 = vmatprep.subr.mxu0 0.0
        %1044 = vmatpush2.msra.mxu0 0.0
        %1045 = vmatprep.subr.mxu0 0.0
        %1046 = vmatpush2.msra.mxu0 0.0
        %1047 = vmatprep.subr.mxu0 0.0
        %1048 = vmatpush2.msra.mxu0 0.0
        %1049 = vmatprep.subr.mxu0 0.0
        %1050 = vmatpush2.msra.mxu0 0.0
        %1051 = vmatprep.subr.mxu0 0.0
        %1052 = vmatpush2.msra.mxu0 0.0
        %1053 = vmatprep.subr.mxu0 0.0
        %1054 = vmatpush2.msra.mxu0 0.0
        %1055 = vmatprep.subr.mxu0 0.0
        %1056 = vmatpush2.msra.mxu0 0.0
        %1057 = vmatprep.subr.mxu0 0.0
        %1058 = vmatpush2.msra.mxu0 0.0
        %1059 = vmatprep.subr.mxu0 0.0
        %1060 = vmatpush2.msra.mxu0 0.0
        %1061 = vmatprep.subr.mxu0 0.0
        %1062 = vmatpush2.msra.mxu0 0.0
        %1063 = vmatprep.subr.mxu0 0.0
        %1064 = vmatpush2.msra.mxu0 0.0
        %1065 = vmatprep.subr.mxu0 0.0
        %1066 = vmatpush2.msra.mxu0 0.0
        %1067 = vmatprep.subr.mxu0 0.0
        %1068 = vmatpush2.msra.mxu0 0.0
        %1069 = vmatprep.subr.mxu0 0.0
        %1070 = vmatpush2.msra.mxu0 0.0
        %1071 = vmatprep.subr.mxu0 0.0
        %1072 = vmatpush2.msra.mxu0 0.0
        %1073 = vmatprep.mubr.f32.mxu0 0.0
        %1074 = vmatmul.mubr.f32.gmra.mxu0 %v1004
        %v1075 = vpop.f32.mrf.mxu0
        %v1076 = vadd.f32 0.0, %v1075
        %v1077 = vpop.f32.mrf.mxu0
        %1078 = vmatprep.mubr.f32.mxu0 0.0
        %1079 = vmatmul.mubr.f32.gmra.mxu0 %v1007
        %v1080 = vpop.f32.mrf.mxu0
        %v1081 = vadd.f32 0.0, %v1080
        %v1082 = vpop.f32.mrf.mxu0
        %1083 = vdwg.mxu0
        %v1084 = vrcp.pop %v996
        %v1085 = vrcp.pop %v999
        %v1086 = vmul.f32 %v1076, %v1084
        %v1087 = vmul.f32 %v1081, %v1085
        %1090 = vrot.lane.b32.xlu0 %v1086, 32
        %v1091 = vpop.permute.xlu0 %1090
        %1092 = vrot.lane.b32.xlu0 %v1087, 32
        %v1093 = vpop.permute.xlu0 %1092
        %vm1096 = vcmask 392448
        %1097 = vst.msk [vmem:[#allocation3] sm:$0xff] %vm1096, %v1091
        %1098 = vst.msk [vmem:[#allocation3 + $0x8] sm:$0xff] %vm1096, %v1093
        %v1099 = vld [vmem:[#allocation2] sm:$0xff]
        %1100 = vrot.lane.b32.xlu0 %v490, 80
        %v1101 = vpop.permute.xlu0 %1100
        %1102 = vrot.lane.b32.xlu0 %v491, 80
        %v1103 = vpop.permute.xlu0 %1102
        %1105 = vrot.lane.b32.xlu0 %v1099, 80
        %v1106 = vpop.permute.xlu0 %1105
        %v1107 = vsel %vm493, %v1101, 0
        %v1109 = vsel %vm493, %v1103, 0
        %v1111 = vsel %vm493, %v1106, 0
        %1113 = vmatprep.subr.mxu0 0.0
        %1114 = vmatpush1.xpose.msra.mxu0 0.0
        %1115 = vmatprep.subr.mxu0 0.0
        %1116 = vmatpush1.xpose.msra.mxu0 0.0
        %1117 = vmatprep.subr.mxu0 0.0
        %1118 = vmatpush1.xpose.msra.mxu0 0.0
        %1119 = vmatprep.subr.mxu0 0.0
        %1120 = vmatpush1.xpose.msra.mxu0 0.0
        %1121 = vmatprep.subr.mxu0 0.0
        %1122 = vmatpush1.xpose.msra.mxu0 0.0
        %1123 = vmatprep.subr.mxu0 0.0
        %1124 = vmatpush1.xpose.msra.mxu0 0.0
        %1125 = vmatprep.subr.mxu0 0.0
        %1126 = vmatpush1.xpose.msra.mxu0 0.0
        %1127 = vmatprep.subr.mxu0 0.0
        %1128 = vmatpush1.xpose.msra.mxu0 0.0
        %1129 = vmatprep.subr.mxu0 0.0
        %1130 = vmatpush1.xpose.msra.mxu0 0.0
        %1131 = vmatprep.subr.mxu0 0.0
        %1132 = vmatpush1.xpose.msra.mxu0 0.0
        %1133 = vmatprep.subr.mxu0 0.0
        %1134 = vmatpush1.xpose.msra.mxu0 0.0
        %1135 = vmatprep.subr.mxu0 0.0
        %1136 = vmatpush1.xpose.msra.mxu0 0.0
        %1137 = vmatprep.subr.mxu0 0.0
        %1138 = vmatpush1.xpose.msra.mxu0 0.0
        %1139 = vmatprep.subr.mxu0 0.0
        %1140 = vmatpush1.xpose.msra.mxu0 0.0
        %1141 = vmatprep.subr.mxu0 0.0
        %1142 = vmatpush1.xpose.msra.mxu0 0.0
        %1143 = vmatprep.subr.mxu0 0.0
        %1144 = vmatpush1.xpose.msra.mxu0 %v1111
        %1145 = vmatprep.subr.mxu0 0.0
        %1146 = vmatpush2.xpose.msra.mxu0 0.0
        %1147 = vmatprep.subr.mxu0 0.0
        %1148 = vmatpush2.xpose.msra.mxu0 0.0
        %1149 = vmatprep.subr.mxu0 0.0
        %1150 = vmatpush2.xpose.msra.mxu0 0.0
        %1151 = vmatprep.subr.mxu0 0.0
        %1152 = vmatpush2.xpose.msra.mxu0 0.0
        %1153 = vmatprep.subr.mxu0 0.0
        %1154 = vmatpush2.xpose.msra.mxu0 0.0
        %1155 = vmatprep.subr.mxu0 0.0
        %1156 = vmatpush2.xpose.msra.mxu0 0.0
        %1157 = vmatprep.subr.mxu0 0.0
        %1158 = vmatpush2.xpose.msra.mxu0 0.0
        %1159 = vmatprep.subr.mxu0 0.0
        %1160 = vmatpush2.xpose.msra.mxu0 0.0
        %1161 = vmatprep.subr.mxu0 0.0
        %1162 = vmatpush2.xpose.msra.mxu0 0.0
        %1163 = vmatprep.subr.mxu0 0.0
        %1164 = vmatpush2.xpose.msra.mxu0 0.0
        %1165 = vmatprep.subr.mxu0 0.0
        %1166 = vmatpush2.xpose.msra.mxu0 0.0
        %1167 = vmatprep.subr.mxu0 0.0
        %1168 = vmatpush2.xpose.msra.mxu0 0.0
        %1169 = vmatprep.subr.mxu0 0.0
        %1170 = vmatpush2.xpose.msra.mxu0 0.0
        %1171 = vmatprep.subr.mxu0 0.0
        %1172 = vmatpush2.xpose.msra.mxu0 0.0
        %1173 = vmatprep.subr.mxu0 0.0
        %1174 = vmatpush2.xpose.msra.mxu0 0.0
        %1175 = vmatprep.subr.mxu0 0.0
        %1176 = vmatpush2.xpose.msra.mxu0 0.0
        %1177 = vmatprep.mubr.f32.mxu0 0.0
        %1178 = vmatmul.mubr.f32.gmra.mxu0 %v1107
        %v1179 = vpop.f32.mrf.mxu0
        %v1180 = vadd.f32 0.0, %v1179
        %v1181 = vpop.f32.mrf.mxu0
        %1182 = vmatprep.mubr.f32.mxu0 0.0
        %1183 = vmatmul.mubr.f32.gmra.mxu0 %v1109
        %v1184 = vpop.f32.mrf.mxu0
        %v1185 = vadd.f32 0.0, %v1184
        %v1186 = vpop.f32.mrf.mxu0
        %1187 = vdwg.mxu0
        %v1188 = vsel %vm578, %v1180, -inf
        %1189 = vmax.xlane.f32.xlu0 %v1188
        %v1190 = vpop.xlane.xlu0 %1189
        %v1191 = vsel %vm578, %v1185, -inf
        %1192 = vmax.xlane.f32.xlu0 %v1191
        %v1193 = vpop.xlane.xlu0 %1192
        %v1194 = vsub.f32 %v1180, %v1190
        %v1195 = vsub.f32 %v1185, %v1193
        %v1196 = vmul.f32 %v1194, 1.442695
        %v1197 = vpow.pop %v1196
        %v1198 = vmul.f32 %v1195, 1.442695
        %v1199 = vpow.pop %v1198
        %v1200 = vsel %vm578, %v1197, 0.0
        %1201 = vadd.xlane.f32.xlu0 %v1200
        %v1202 = vpop.xlane.xlu0 %1201
        %v1203 = vsel %vm578, %v1199, 0.0
        %1204 = vadd.xlane.f32.xlu0 %v1203
        %v1205 = vpop.xlane.xlu0 %1204
        %1206 = vrot.lane.b32.xlu0 %v1099, 16
        %v1207 = vpop.permute.xlu0 %1206
        %v1210 = vsel %vm578, %v1197, 0
        %v1213 = vsel %vm578, %v1199, 0
        %1215 = vmatprep.subr.mxu0 0.0
        %1216 = vmatpush1.msra.mxu0 0.0
        %1217 = vmatprep.subr.mxu0 0.0
        %1218 = vmatpush1.msra.mxu0 0.0
        %1219 = vmatprep.subr.mxu0 0.0
        %1220 = vmatpush1.msra.mxu0 0.0
        %1221 = vmatprep.subr.mxu0 0.0
        %1222 = vmatpush1.msra.mxu0 0.0
        %1223 = vmatprep.subr.mxu0 0.0
        %1224 = vmatpush1.msra.mxu0 0.0
        %1225 = vmatprep.subr.mxu0 0.0
        %1226 = vmatpush1.msra.mxu0 0.0
        %1227 = vmatprep.subr.mxu0 0.0
        %1228 = vmatpush1.msra.mxu0 0.0
        %1229 = vmatprep.subr.mxu0 0.0
        %1230 = vmatpush1.msra.mxu0 0.0
        %1231 = vmatprep.subr.mxu0 0.0
        %1232 = vmatpush1.msra.mxu0 0.0
        %1233 = vmatprep.subr.mxu0 0.0
        %1234 = vmatpush1.msra.mxu0 0.0
        %1235 = vmatprep.subr.mxu0 0.0
        %1236 = vmatpush1.msra.mxu0 0.0
        %1237 = vmatprep.subr.mxu0 0.0
        %1238 = vmatpush1.msra.mxu0 0.0
        %1239 = vmatprep.subr.mxu0 0.0
        %1240 = vmatpush1.msra.mxu0 0.0
        %1241 = vmatprep.subr.mxu0 0.0
        %1242 = vmatpush1.msra.mxu0 0.0
        %1243 = vmatprep.subr.mxu0 0.0
        %1244 = vmatpush1.msra.mxu0 0.0
        %1245 = vmatprep.subr.mxu0 0.0
        %1246 = vmatpush1.msra.mxu0 %v1207
        %1247 = vmatprep.subr.mxu0 0.0
        %1248 = vmatpush2.msra.mxu0 0.0
        %1249 = vmatprep.subr.mxu0 0.0
        %1250 = vmatpush2.msra.mxu0 0.0
        %1251 = vmatprep.subr.mxu0 0.0
        %1252 = vmatpush2.msra.mxu0 0.0
        %1253 = vmatprep.subr.mxu0 0.0
        %1254 = vmatpush2.msra.mxu0 0.0
        %1255 = vmatprep.subr.mxu0 0.0
        %1256 = vmatpush2.msra.mxu0 0.0
        %1257 = vmatprep.subr.mxu0 0.0
        %1258 = vmatpush2.msra.mxu0 0.0
        %1259 = vmatprep.subr.mxu0 0.0
        %1260 = vmatpush2.msra.mxu0 0.0
        %1261 = vmatprep.subr.mxu0 0.0
        %1262 = vmatpush2.msra.mxu0 0.0
        %1263 = vmatprep.subr.mxu0 0.0
        %1264 = vmatpush2.msra.mxu0 0.0
        %1265 = vmatprep.subr.mxu0 0.0
        %1266 = vmatpush2.msra.mxu0 0.0
        %1267 = vmatprep.subr.mxu0 0.0
        %1268 = vmatpush2.msra.mxu0 0.0
        %1269 = vmatprep.subr.mxu0 0.0
        %1270 = vmatpush2.msra.mxu0 0.0
        %1271 = vmatprep.subr.mxu0 0.0
        %1272 = vmatpush2.msra.mxu0 0.0
        %1273 = vmatprep.subr.mxu0 0.0
        %1274 = vmatpush2.msra.mxu0 0.0
        %1275 = vmatprep.subr.mxu0 0.0
        %1276 = vmatpush2.msra.mxu0 0.0
        %1277 = vmatprep.subr.mxu0 0.0
        %1278 = vmatpush2.msra.mxu0 0.0
        %1279 = vmatprep.mubr.f32.mxu0 0.0
        %1280 = vmatmul.mubr.f32.gmra.mxu0 %v1210
        %v1281 = vpop.f32.mrf.mxu0
        %v1282 = vadd.f32 0.0, %v1281
        %v1283 = vpop.f32.mrf.mxu0
        %1284 = vmatprep.mubr.f32.mxu0 0.0
        %1285 = vmatmul.mubr.f32.gmra.mxu0 %v1213
        %v1286 = vpop.f32.mrf.mxu0
        %v1287 = vadd.f32 0.0, %v1286
        %v1288 = vpop.f32.mrf.mxu0
        %1289 = vdwg.mxu0
        %v1290 = vrcp.pop %v1202
        %v1291 = vrcp.pop %v1205
        %v1292 = vmul.f32 %v1282, %v1290
        %v1293 = vmul.f32 %v1287, %v1291
        %1296 = vrot.lane.b32.xlu0 %v1292, 48
        %v1297 = vpop.permute.xlu0 %1296
        %1298 = vrot.lane.b32.xlu0 %v1293, 48
        %v1299 = vpop.permute.xlu0 %1298
        %vm1302 = vcmask 523648
        %1303 = vst.msk [vmem:[#allocation3] sm:$0xff] %vm1302, %v1297
        %1304 = vst.msk [vmem:[#allocation3 + $0x8] sm:$0xff] %vm1302, %v1299
        %v1305 = vld [vmem:[#allocation3] sm:$0xff]
        %v1306 = vld [vmem:[#allocation3 + $0x8] sm:$0xff]
        %v1307 = vld [vmem:[%s4] sm:$0xff]
        %v1308 = vld [vmem:[%s4 + $0x8] sm:$0xff]
        %v1309 = vld [vmem:[%s4 + $0x10] sm:$0xff]
        %v1310 = vld [vmem:[%s4 + $0x18] sm:$0xff]
        %v1311 = vld [vmem:[%s4 + $0x20] sm:$0xff]
        %v1312 = vld [vmem:[%s4 + $0x28] sm:$0xff]
        %v1313 = vld [vmem:[%s4 + $0x30] sm:$0xff]
        %v1314 = vld [vmem:[%s4 + $0x38] sm:$0xff]
        %v1315 = vld [vmem:[%s5] sm:$0x1]
        %v1317 = vlaneseq
        %v1318 = vshrl.u32 %v1317, 7
        %v1319 = vsub.s32 0, %v1318
        %v1320 = vrot.slane %v1315, %v1319
        %vm1322 = vcmask 523264
        %v1324 = vsel %vm1322, %v1305, 0
        %v1327 = vsel %vm1322, %v1306, 0
        %1329 = vmatprep.subr.mxu0 0.0
        %1330 = vmatpush1.msra.mxu0 0.0
        %1331 = vmatprep.subr.mxu0 0.0
        %1332 = vmatpush1.msra.mxu0 0.0
        %1333 = vmatprep.subr.mxu0 0.0
        %1334 = vmatpush1.msra.mxu0 0.0
        %1335 = vmatprep.subr.mxu0 0.0
        %1336 = vmatpush1.msra.mxu0 0.0
        %1337 = vmatprep.subr.mxu0 0.0
        %1338 = vmatpush1.msra.mxu0 0.0
        %1339 = vmatprep.subr.mxu0 0.0
        %1340 = vmatpush1.msra.mxu0 0.0
        %1341 = vmatprep.subr.mxu0 0.0
        %1342 = vmatpush1.msra.mxu0 0.0
        %1343 = vmatprep.subr.mxu0 0.0
        %1344 = vmatpush1.msra.mxu0 0.0
        %1345 = vmatprep.subr.mxu0 0.0
        %1346 = vmatpush1.msra.mxu0 %v1314
        %1347 = vmatprep.subr.mxu0 0.0
        %1348 = vmatpush1.msra.mxu0 %v1313
        %1349 = vmatprep.subr.mxu0 0.0
        %1350 = vmatpush1.msra.mxu0 %v1312
        %1351 = vmatprep.subr.mxu0 0.0
        %1352 = vmatpush1.msra.mxu0 %v1311
        %1353 = vmatprep.subr.mxu0 0.0
        %1354 = vmatpush1.msra.mxu0 %v1310
        %1355 = vmatprep.subr.mxu0 0.0
        %1356 = vmatpush1.msra.mxu0 %v1309
        %1357 = vmatprep.subr.mxu0 0.0
        %1358 = vmatpush1.msra.mxu0 %v1308
        %1359 = vmatprep.subr.mxu0 0.0
        %1360 = vmatpush1.msra.mxu0 %v1307
        %1361 = vmatprep.subr.mxu0 0.0
        %1362 = vmatpush2.msra.mxu0 0.0
        %1363 = vmatprep.subr.mxu0 0.0
        %1364 = vmatpush2.msra.mxu0 0.0
        %1365 = vmatprep.subr.mxu0 0.0
        %1366 = vmatpush2.msra.mxu0 0.0
        %1367 = vmatprep.subr.mxu0 0.0
        %1368 = vmatpush2.msra.mxu0 0.0
        %1369 = vmatprep.subr.mxu0 0.0
        %1370 = vmatpush2.msra.mxu0 0.0
        %1371 = vmatprep.subr.mxu0 0.0
        %1372 = vmatpush2.msra.mxu0 0.0
        %1373 = vmatprep.subr.mxu0 0.0
        %1374 = vmatpush2.msra.mxu0 0.0
        %1375 = vmatprep.subr.mxu0 0.0
        %1376 = vmatpush2.msra.mxu0 0.0
        %1377 = vmatprep.subr.mxu0 0.0
        %1378 = vmatpush2.msra.mxu0 0.0
        %1379 = vmatprep.subr.mxu0 0.0
        %1380 = vmatpush2.msra.mxu0 0.0
        %1381 = vmatprep.subr.mxu0 0.0
        %1382 = vmatpush2.msra.mxu0 0.0
        %1383 = vmatprep.subr.mxu0 0.0
        %1384 = vmatpush2.msra.mxu0 0.0
        %1385 = vmatprep.subr.mxu0 0.0
        %1386 = vmatpush2.msra.mxu0 0.0
        %1387 = vmatprep.subr.mxu0 0.0
        %1388 = vmatpush2.msra.mxu0 0.0
        %1389 = vmatprep.subr.mxu0 0.0
        %1390 = vmatpush2.msra.mxu0 0.0
        %1391 = vmatprep.subr.mxu0 0.0
        %1392 = vmatpush2.msra.mxu0 0.0
        %1393 = vmatprep.mubr.f32.mxu0 0.0
        %1394 = vmatmul.mubr.f32.gmra.mxu0 %v1324
        %v1395 = vpop.f32.mrf.mxu0
        %v1396 = vadd.f32 %v1320, %v1395
        %v1397 = vpop.f32.mrf.mxu0
        %1398 = vmatprep.mubr.f32.mxu0 0.0
        %1399 = vmatmul.mubr.f32.gmra.mxu0 %v1327
        %v1400 = vpop.f32.mrf.mxu0
        %v1401 = vadd.f32 %v1320, %v1400
        %v1402 = vpop.f32.mrf.mxu0
        %1403 = vdwg.mxu0
        %1404 = vst.msk [vmem:[%s306] sm:$0xff] %vm408, %v1396
        %1405 = vst.msk [vmem:[%s306 + $0x8] sm:$0xff] %vm408, %v1401
        %s1406 = sand.u32 %s183, 1
        %s1407 = scalar_lea.sflag [#allocation6], %s1406
        %s1408 = sand.u32 %s183, 1
        %s1409 = smul.addr %s1408, 16
        %s1410 = scalar_lea.vmem [#allocation7], %s1409
        // Predicated region
        $region53: #{tpu_custom_call.1} parent=43 // pred_check
          %p1411 = pneg %p193
        $region54: #{tpu_custom_call.1} parent=43 // pred_check_branch
          %1413 = sbr.rel (%p1411) target = $region56
        $region55: #{tpu_custom_call.1} parent=43 // pred_region
          %s1414 = smul.u32 2, %s28
          %s1416 = ssub.s32 256, 256
          %1417 = vsyncadd %s1407, %s1416
          %s1418 = smul.addr %s27, 2
          %s1419 = sadd.s32 %s1414, %s1418
          %s1420 = smul.addr %s1419, 128
          %s1421 = scalar_lea.hbm %s6, %s1420
          %s1422 = sshll.u32 %s1410, 4
          %s1423 = int_to_ptr.vmem [resolvable:$true] %s1422
          %1428 = dma.vmem_to_hbm [thread:$0]  %s1423, 256, %s1421, %s1407, 128, 128, 8
        $region56: #{tpu_custom_call.1} parent=43 // pred_fallthru
          _
      $region44: #{tpu_custom_call.1} parent=5 // pred_fallthru
        _
      %p1429 = scmp.le.s32.totalorder 2, %s18
      // Predicated region
      $region57: #{tpu_custom_call.1} parent=5 // pred_check
        %p1430 = pneg %p1429
      $region58: #{tpu_custom_call.1} parent=5 // pred_check_branch
        %1432 = sbr.rel (%p1430) target = $region60
      $region59: #{tpu_custom_call.1} parent=5 // pred_region
        %s1433 = ssub.s32 %s18, 2
        // Predicated region
        $region61: #{tpu_custom_call.1} parent=59 // pred_check
          %p1434 = pneg %p199
        $region62: #{tpu_custom_call.1} parent=59 // pred_check_branch
          %1436 = sbr.rel (%p1434) target = $region64
        $region63: #{tpu_custom_call.1} parent=59 // pred_region
          %s1437 = sand.u32 %s184, 1
          %s1438 = scalar_lea.sflag [#allocation6], %s1437
          %s1439 = sand.u32 %s184, 1
          %s1440 = smul.addr %s1439, 16
          %s1441 = scalar_lea.vmem [#allocation7], %s1440
          %1442 = dma.done %s1438, 256
        $region64: #{tpu_custom_call.1} parent=59 // pred_fallthru
          _
      $region60: #{tpu_custom_call.1} parent=5 // pred_fallthru
        _
    $region6: #{tpu_custom_call.1} parent=1 // loop_footer
      %s22 = sadd.s32 1, %s18
    $region7: #{tpu_custom_call.1} parent=1 // loop_footer_branch
      %17 = sbr.rel target = $region3
    $region8: #{tpu_custom_call.1} parent=1 // loop_exit
      _
    %1443 = vsyncpa [#allocation5], 1
    %s1444 = scalar_lea.sflag [#allocation5], 1
    %1445 = vsyncpa %s1444, 1
    %1446 = vsyncpa [#allocation6], 1
    %s1447 = scalar_lea.sflag [#allocation6], 1
    %1448 = vsyncpa %s1447, 1

</llo_original>
